<compile_context>
chip_gen: v7x
topology: tpu7x:2x2x1
jax: 0.10.0
libtpu: 0.0.40
codegen_flags: <defaults>
</compile_context>

<pallas_src>
import functools

import jax
import jax.numpy as jnp
from jax import lax
from jax.experimental import pallas as pl
from jax.experimental.pallas import tpu as pltpu


# ----------------------------------------------------------------------------
# Fused kernel.  Grid: (B, HW // T).
#   step (b, k): gather the sampled columns that fall in HW tile k of batch b
#   via a one-hot MXU contraction into acc (P, C);
#   on the last tile: L2-normalize each patch row over channels
#   (PyTorch Normalize(power=2): out = x / (||x||_2 + 1e-7)) and store (1,P,C).
# ----------------------------------------------------------------------------
def _gather_l2norm_kernel(ids_ref, feat_ref, out_ref, acc_ref):
    k = pl.program_id(1)                    # HW streaming / reduction axis
    nk = pl.num_programs(1)

    @pl.when(k == 0)
    def _init():
        acc_ref[...] = jnp.zeros_like(acc_ref)

    feat = feat_ref[0]                      # (C, T) tile of this batch
    t = feat.shape[1]
    p = ids_ref.shape[0]

    # One-hot rows: sel[p, j] = (patch_id[p] == k*T + j).  Exactly one 1 per
    # row across the whole HW grid, so the contraction below is a pure gather.
    local = ids_ref[...] - k * t                              # (P, 1) int32
    j_iota = lax.broadcasted_iota(jnp.int32, (p, t), 1)       # (P, T)
    sel = (j_iota == local).astype(feat.dtype)                # (P, T)

    # acc[p, c] += sum_j sel[p, j] * feat[c, j]   (q @ k.T-style NT matmul)
    acc_ref[...] += lax.dot_general(
        sel, feat, (((1,), (1,)), ((), ())),
        precision=lax.Precision.HIGHEST,
        preferred_element_type=jnp.float32)                   # (P, C) f32

    @pl.when(k == nk - 1)
    def _finalize():
        x = acc_ref[...]                                      # (P, C)
        sq = jnp.sum(x * x, axis=1, keepdims=True)            # (P, 1) lane reduce
        inv = pl.reciprocal(jnp.sqrt(sq) + 1e-7, approx=False)
        out_ref[...] = (x * inv)[None, :, :].astype(out_ref.dtype)


def _choose_hw_tile(C, HW, itemsize, max_block_bytes):
    """Largest multiple-of-128 divisor of HW whose (C, T) feature block fits
    max_block_bytes; fall back to the full HW extent (always a legal block,
    and guarantees the grid tiles HW exactly -> no padded-garbage columns)."""
    best = None
    t = 128
    while t <= HW:
        if HW % t == 0 and C * t * itemsize <= max_block_bytes:
            best = t
        t += 128
    return HW if best is None else best


def gather_l2norm_pallas(feat_flat, patch_id, *, max_block_bytes=2 << 20):
    """feat_flat: (B, C, HW); patch_id: (P,) int32.
    Returns (B, P, C): out[b, p, :] = L2-normalized feat_flat[b, :, patch_id[p]]."""
    B, C, HW = feat_flat.shape
    P = patch_id.shape[0]
    itemsize = jnp.dtype(feat_flat.dtype).itemsize
    T = _choose_hw_tile(C, HW, itemsize, max_block_bytes)
    grid = (B, HW // T)

    ids2d = patch_id.astype(jnp.int32).reshape(P, 1)

    cost = pl.CostEstimate(
        flops=2 * B * C * HW * P,
        transcendentals=0,
        bytes_accessed=int(B * C * HW) * itemsize + int(B * P * C) * itemsize + P * 4,
    )

    return pl.pallas_call(
        _gather_l2norm_kernel,
        out_shape=jax.ShapeDtypeStruct((B, P, C), feat_flat.dtype),
        grid_spec=pltpu.PrefetchScalarGridSpec(
            num_scalar_prefetch=0,
            grid=grid,
            in_specs=[
                pl.BlockSpec((P, 1), lambda b, k: (0, 0)),        # patch ids
                pl.BlockSpec((1, C, T), lambda b, k: (b, 0, k)),  # feature tile
            ],
            out_specs=pl.BlockSpec((1, P, C), lambda b, k: (b, 0, 0)),
            scratch_shapes=[pltpu.VMEM((P, C), jnp.float32)],
        ),
        compiler_params=pltpu.CompilerParams(
            dimension_semantics=("parallel", "arbitrary")),
        cost_estimate=cost,
    )(ids2d, feat_flat)


# ----------------------------------------------------------------------------
# Deterministic parameter init for the (unused with use_mlp=False) conv/mlp
# sub-modules, mirroring PatchSampleF.__init__ shapes (init_type='normal',
# init_gain=0.02).  Never applied in the default forward, same as PyTorch.
# ----------------------------------------------------------------------------
def init_patch_sample_f_params(nc=256, init_gain=0.02, seed=1234):
    k = jax.random.PRNGKey(seed)
    ks = jax.random.split(k, 4)
    return {
        "conv0_w": init_gain * jax.random.normal(ks[0], (1, 1, 3, 3), jnp.float32),
        "conv0_b": jnp.zeros((1,), jnp.float32),
        "conv1_w": init_gain * jax.random.normal(ks[1], (1, 1, 3, 3), jnp.float32),
        "conv1_b": jnp.zeros((1,), jnp.float32),
        "lin0_w": init_gain * jax.random.normal(ks[2], (nc, 1), jnp.float32),
        "lin0_b": jnp.zeros((nc,), jnp.float32),
        "lin1_w": init_gain * jax.random.normal(ks[3], (nc, nc), jnp.float32),
        "lin1_b": jnp.zeros((nc,), jnp.float32),
    }


# ----------------------------------------------------------------------------
# PatchSampleF.forward (use_mlp=False, num_patches > 0 path), fully jitted.
# ----------------------------------------------------------------------------
@functools.partial(jax.jit, static_argnames=("num_patches",))
def _forward_impl(feats, patch_ids, rng_key, num_patches):
    return_ids = []
    return_feats = []
    keys = jax.random.split(rng_key, len(feats))
    # TODO(synk): layers with different (C, HW) are launched as separate fused
    # calls; batching all layers into one pallas_call (channel-padded slabs or
    # a layer grid axis) would further amortize the ~1-2 us per-call overhead.
    for feat_id, feat in enumerate(feats):
        B, C, H, W = feat.shape
        HW = H * W

        # (B, C, H, W) -> (B, C, H*W): pure reshape, no relayout of the map.
        feat_flat = feat.reshape(B, C, HW)

        if patch_ids is not None:
            patch_id = jnp.asarray(patch_ids[feat_id], dtype=jnp.int32)
        else:
            # TODO(synk): jax.random.permutation does not bit-reproduce the
            # np.random.permutation sampling of the PyTorch module
            # (behavioral, not numerical, divergence).
            perm = jax.random.permutation(keys[feat_id], HW)
            patch_id = perm[: int(min(num_patches, HW))].astype(jnp.int32)

        # Fused gather + L2 norm; output already in (B, P, C) layout.
        sampled = gather_l2norm_pallas(feat_flat, patch_id)       # (B, P, C)
        x_sample = sampled.reshape(B * patch_id.shape[0], C)      # free reshape

        return_ids.append(patch_id)
        return_feats.append(x_sample)
    return tuple(return_feats), tuple(return_ids)


def patch_sample_f_forward(feats, num_patches=64, patch_ids=None, rng_key=None):
    """
    feats: list of NCHW arrays (B, C, H, W).
    Returns (return_feats, return_ids) like the PyTorch module:
      return_feats[i]: (B * P_i, C_i)  L2-normalized sampled patch features
      return_ids[i]:   (P_i,) int32    sampled spatial indices into H*W
    """
    # TODO(synk): use_mlp=True branch (per-channel conv + MLP) and the
    # num_patches == 0 branch (full map + NCHW re-pack) are not implemented;
    # the module defaults (use_mlp=False, num_patches=64) are exercised here.
    if rng_key is None:
        rng_key = jax.random.PRNGKey(0)
    feats = tuple(feats)
    if patch_ids is not None:
        patch_ids = tuple(jnp.asarray(p, dtype=jnp.int32) for p in patch_ids)
    out_feats, out_ids = _forward_impl(feats, patch_ids, rng_key,
                                       num_patches=num_patches)
    return list(out_feats), list(out_ids)


# Pure-JAX reference for correctness checking (mirrors the PyTorch module).
def _l2norm_ref(x):
    norm = jnp.sqrt(jnp.sum(x.astype(jnp.float32) ** 2, axis=1, keepdims=True))
    return (x / (norm + 1e-7)).astype(x.dtype)


if __name__ == "__main__":
    key = jax.random.PRNGKey(0)
    k_feat0, k_feat1, k_ids = jax.random.split(key, 3)

    # Small NCHW feature maps (two "layers", like the list `feats`).
    feats = [
        jax.random.normal(k_feat0, (2, 4, 16, 16), jnp.float32),  # B=2, C=4, 16x16
        jax.random.normal(k_feat1, (2, 8, 8, 8), jnp.float32),    # B=2, C=8, 8x8
    ]

    # Unused (use_mlp=False) but initialized deterministically per __init__.
    _params = init_patch_sample_f_params(nc=256)

    out_feats, out_ids = patch_sample_f_forward(
        feats, num_patches=64, patch_ids=None, rng_key=k_ids
    )
    out_feats = [jax.block_until_ready(f) for f in out_feats]

    # Correctness check against a pure-JAX reference of the full forward.
    ok = True
    for feat, pid, got in zip(feats, out_ids, out_feats):
        B, C, H, W = feat.shape
        fr = jnp.transpose(feat, (0, 2, 3, 1)).reshape(B, H * W, C)
        xs = jnp.take(fr, pid, axis=1).reshape(B * pid.shape[0], C)
        ref = _l2norm_ref(xs)
        ok = ok and (got.shape == (B * pid.shape[0], C))
        ok = ok and bool(jnp.allclose(got, ref, atol=2e-5, rtol=2e-5))

    if ok:
        print("KERNEL_OK")
    else:
        raise SystemExit("mismatch vs reference")
</pallas_src>

<mosaic_0001>
module attributes {stable_mosaic.version = 11 : i64} {
  func.func @_gather_l2norm_kernel(%arg0: i32, %arg1: i32, %arg2: memref<64x1xi32, #tpu.memory_space<vmem>>, %arg3: memref<1x4x256xf32, #tpu.memory_space<vmem>>, %arg4: memref<1x64x4xf32, #tpu.memory_space<vmem>>, %arg5: memref<64x4xf32, #tpu.memory_space<vmem>>) attributes {dimension_semantics = [#tpu.dimension_semantics<parallel>, #tpu.dimension_semantics<arbitrary>], iteration_bounds = array<i64: 2, 1>, scalar_prefetch = 0 : i64, scratch_operands = 1 : i64, tpu.core_type = #tpu.core_type<tc>, window_params = [{pipeline_mode = #tpu.pipeline_mode<synchronous>, transform_indices = @transform_0, window_bounds = array<i64: 64, 1>}, {transform_indices = @transform_1, window_bounds = array<i64: 1, 4, 256>}, {transform_indices = @transform_2, window_bounds = array<i64: 1, 64, 4>}]} {
    %c0_i32 = arith.constant 0 : i32
    %0 = arith.cmpi eq, %arg1, %c0_i32 : i32
    %1 = arith.extui %0 : i1 to i32
    %c0_i32_0 = arith.constant 0 : i32
    %2 = arith.cmpi ne, %1, %c0_i32_0 : i32
    scf.if %2 {
      %cst_11 = arith.constant 0.000000e+00 : f32
      %21 = vector.broadcast %cst_11 : f32 to vector<64x4xf32>
      %c0_12 = arith.constant 0 : index
      %c0_13 = arith.constant 0 : index
      %22 = vector.load %arg5[%c0_12, %c0_13] : memref<64x4xf32, #tpu.memory_space<vmem>>, vector<64x4xf32>
      tpu.vector_store %arg5[%c0_12, %c0_13], %21 {strides = array<i32>} : memref<64x4xf32, #tpu.memory_space<vmem>>, vector<64x4xf32>,
    } else {
    }
    %c0 = arith.constant 0 : index
    %c0_1 = arith.constant 0 : index
    %c0_2 = arith.constant 0 : index
    %3 = vector.load %arg3[%c0, %c0_1, %c0_2] : memref<1x4x256xf32, #tpu.memory_space<vmem>>, vector<1x4x256xf32>
    %4 = vector.shape_cast %3 : vector<1x4x256xf32> to vector<4x256xf32>
    %c0_3 = arith.constant 0 : index
    %c0_4 = arith.constant 0 : index
    %5 = vector.load %arg2[%c0_3, %c0_4] : memref<64x1xi32, #tpu.memory_space<vmem>>, vector<64x1xi32>
    %c256_i32 = arith.constant 256 : i32
    %6 = arith.muli %arg1, %c256_i32 : i32
    %7 = vector.broadcast %6 : i32 to vector<64x1xi32>
    %8 = arith.subi %5, %7 : vector<64x1xi32>
    %9 = tpu.iota {dimensions = array<i32: 1>} : vector<64x256xi32>
    %10 = vector.broadcast %8 : vector<64x1xi32> to vector<64x256xi32>
    %11 = arith.cmpi eq, %9, %10 : vector<64x256xi32>
    %12 = arith.extui %11 : vector<64x256xi1> to vector<64x256xi32>
    %13 = arith.sitofp %12 : vector<64x256xi32> to vector<64x256xf32>
    %c0_5 = arith.constant 0 : index
    %c0_6 = arith.constant 0 : index
    %14 = vector.load %arg5[%c0_5, %c0_6] : memref<64x4xf32, #tpu.memory_space<vmem>>, vector<64x4xf32>
    %cst = arith.constant dense<0.000000e+00> : vector<64x4xf32>
    %15 = tpu.matmul %13, %4, %cst {dimension_numbers = #tpu.dot_dimension_numbers<[1], [1], [0], [0], [0, 0, 1, 0], [], []>, precision = #tpu.contract_precision<fp32>} : vector<64x256xf32>, vector<4x256xf32>, vector<64x4xf32> -> vector<64x4xf32>
    %16 = arith.addf %14, %15 : vector<64x4xf32>
    %c0_7 = arith.constant 0 : index
    %c0_8 = arith.constant 0 : index
    %17 = vector.load %arg5[%c0_7, %c0_8] : memref<64x4xf32, #tpu.memory_space<vmem>>, vector<64x4xf32>
    tpu.vector_store %arg5[%c0_7, %c0_8], %16 {strides = array<i32>} : memref<64x4xf32, #tpu.memory_space<vmem>>, vector<64x4xf32>,
    %c0_i32_9 = arith.constant 0 : i32
    %18 = arith.cmpi eq, %arg1, %c0_i32_9 : i32
    %19 = arith.extui %18 : i1 to i32
    %c0_i32_10 = arith.constant 0 : i32
    %20 = arith.cmpi ne, %19, %c0_i32_10 : i32
    scf.if %20 {
      %c0_11 = arith.constant 0 : index
      %c0_12 = arith.constant 0 : index
      %21 = vector.load %arg5[%c0_11, %c0_12] : memref<64x4xf32, #tpu.memory_space<vmem>>, vector<64x4xf32>
      %22 = arith.mulf %21, %21 : vector<64x4xf32>
      %cst_13 = arith.constant dense<0.000000e+00> : vector<64xf32>
      %23 = vector.multi_reduction <add>, %22, %cst_13 [1] : vector<64x4xf32> to vector<64xf32>
      %24 = vector.shape_cast %23 : vector<64xf32> to vector<64x1xf32>
      %25 = math.sqrt %24 : vector<64x1xf32>
      %cst_14 = arith.constant 1.000000e-07 : f32
      %26 = vector.broadcast %cst_14 : f32 to vector<64x1xf32>
      %27 = arith.addf %25, %26 : vector<64x1xf32>
      %28 = tpu.reciprocal %27 : vector<64x1xf32> -> vector<64x1xf32>
      %29 = vector.broadcast %28 : vector<64x1xf32> to vector<64x4xf32>
      %30 = arith.mulf %21, %29 : vector<64x4xf32>
      %31 = vector.shape_cast %30 : vector<64x4xf32> to vector<1x64x4xf32>
      %c0_15 = arith.constant 0 : index
      %c0_16 = arith.constant 0 : index
      %c0_17 = arith.constant 0 : index
      %32 = vector.load %arg4[%c0_15, %c0_16, %c0_17] : memref<1x64x4xf32, #tpu.memory_space<vmem>>, vector<1x64x4xf32>
      tpu.vector_store %arg4[%c0_15, %c0_16, %c0_17], %31 {strides = array<i32>} : memref<1x64x4xf32, #tpu.memory_space<vmem>>, vector<1x64x4xf32>,
    } else {
    }
    return
  }
  func.func @transform_0(%arg0: i32, %arg1: i32) -> (i32, i32) {
    %c0_i32 = arith.constant 0 : i32
    %c0_i32_0 = arith.constant 0 : i32
    %c0_i32_1 = arith.constant 0 : i32
    return %c0_i32, %c0_i32_0 : i32, i32
  }
  func.func @transform_1(%arg0: i32, %arg1: i32) -> (i32, i32, i32) {
    %c0_i32 = arith.constant 0 : i32
    %c0_i32_0 = arith.constant 0 : i32
    return %arg0, %c0_i32, %arg1 : i32, i32, i32
  }
  func.func @transform_2(%arg0: i32, %arg1: i32) -> (i32, i32, i32) {
    %c0_i32 = arith.constant 0 : i32
    %c0_i32_0 = arith.constant 0 : i32
    %c0_i32_1 = arith.constant 0 : i32
    return %arg0, %c0_i32, %c0_i32_0 : i32, i32, i32
  }
}

module attributes {stable_mosaic.version = 11 : i64} {
  func.func @_gather_l2norm_kernel(%arg0: i32, %arg1: i32, %arg2: memref<64x1xi32, #tpu.memory_space<vmem>>, %arg3: memref<1x8x64xf32, #tpu.memory_space<vmem>>, %arg4: memref<1x64x8xf32, #tpu.memory_space<vmem>>, %arg5: memref<64x8xf32, #tpu.memory_space<vmem>>) attributes {dimension_semantics = [#tpu.dimension_semantics<parallel>, #tpu.dimension_semantics<arbitrary>], iteration_bounds = array<i64: 2, 1>, scalar_prefetch = 0 : i64, scratch_operands = 1 : i64, tpu.core_type = #tpu.core_type<tc>, window_params = [{pipeline_mode = #tpu.pipeline_mode<synchronous>, transform_indices = @transform_0, window_bounds = array<i64: 64, 1>}, {transform_indices = @transform_1, window_bounds = array<i64: 1, 8, 64>}, {transform_indices = @transform_2, window_bounds = array<i64: 1, 64, 8>}]} {
    %c0_i32 = arith.constant 0 : i32
    %0 = arith.cmpi eq, %arg1, %c0_i32 : i32
    %1 = arith.extui %0 : i1 to i32
    %c0_i32_0 = arith.constant 0 : i32
    %2 = arith.cmpi ne, %1, %c0_i32_0 : i32
    scf.if %2 {
      %cst_11 = arith.constant 0.000000e+00 : f32
      %21 = vector.broadcast %cst_11 : f32 to vector<64x8xf32>
      %c0_12 = arith.constant 0 : index
      %c0_13 = arith.constant 0 : index
      %22 = vector.load %arg5[%c0_12, %c0_13] : memref<64x8xf32, #tpu.memory_space<vmem>>, vector<64x8xf32>
      tpu.vector_store %arg5[%c0_12, %c0_13], %21 {strides = array<i32>} : memref<64x8xf32, #tpu.memory_space<vmem>>, vector<64x8xf32>,
    } else {
    }
    %c0 = arith.constant 0 : index
    %c0_1 = arith.constant 0 : index
    %c0_2 = arith.constant 0 : index
    %3 = vector.load %arg3[%c0, %c0_1, %c0_2] : memref<1x8x64xf32, #tpu.memory_space<vmem>>, vector<1x8x64xf32>
    %4 = vector.shape_cast %3 : vector<1x8x64xf32> to vector<8x64xf32>
    %c0_3 = arith.constant 0 : index
    %c0_4 = arith.constant 0 : index
    %5 = vector.load %arg2[%c0_3, %c0_4] : memref<64x1xi32, #tpu.memory_space<vmem>>, vector<64x1xi32>
    %c64_i32 = arith.constant 64 : i32
    %6 = arith.muli %arg1, %c64_i32 : i32
    %7 = vector.broadcast %6 : i32 to vector<64x1xi32>
    %8 = arith.subi %5, %7 : vector<64x1xi32>
    %9 = tpu.iota {dimensions = array<i32: 1>} : vector<64x64xi32>
    %10 = vector.broadcast %8 : vector<64x1xi32> to vector<64x64xi32>
    %11 = arith.cmpi eq, %9, %10 : vector<64x64xi32>
    %12 = arith.extui %11 : vector<64x64xi1> to vector<64x64xi32>
    %13 = arith.sitofp %12 : vector<64x64xi32> to vector<64x64xf32>
    %c0_5 = arith.constant 0 : index
    %c0_6 = arith.constant 0 : index
    %14 = vector.load %arg5[%c0_5, %c0_6] : memref<64x8xf32, #tpu.memory_space<vmem>>, vector<64x8xf32>
    %cst = arith.constant dense<0.000000e+00> : vector<64x8xf32>
    %15 = tpu.matmul %13, %4, %cst {dimension_numbers = #tpu.dot_dimension_numbers<[1], [1], [0], [0], [0, 0, 1, 0], [], []>, precision = #tpu.contract_precision<fp32>} : vector<64x64xf32>, vector<8x64xf32>, vector<64x8xf32> -> vector<64x8xf32>
    %16 = arith.addf %14, %15 : vector<64x8xf32>
    %c0_7 = arith.constant 0 : index
    %c0_8 = arith.constant 0 : index
    %17 = vector.load %arg5[%c0_7, %c0_8] : memref<64x8xf32, #tpu.memory_space<vmem>>, vector<64x8xf32>
    tpu.vector_store %arg5[%c0_7, %c0_8], %16 {strides = array<i32>} : memref<64x8xf32, #tpu.memory_space<vmem>>, vector<64x8xf32>,
    %c0_i32_9 = arith.constant 0 : i32
    %18 = arith.cmpi eq, %arg1, %c0_i32_9 : i32
    %19 = arith.extui %18 : i1 to i32
    %c0_i32_10 = arith.constant 0 : i32
    %20 = arith.cmpi ne, %19, %c0_i32_10 : i32
    scf.if %20 {
      %c0_11 = arith.constant 0 : index
      %c0_12 = arith.constant 0 : index
      %21 = vector.load %arg5[%c0_11, %c0_12] : memref<64x8xf32, #tpu.memory_space<vmem>>, vector<64x8xf32>
      %22 = arith.mulf %21, %21 : vector<64x8xf32>
      %cst_13 = arith.constant dense<0.000000e+00> : vector<64xf32>
      %23 = vector.multi_reduction <add>, %22, %cst_13 [1] : vector<64x8xf32> to vector<64xf32>
      %24 = vector.shape_cast %23 : vector<64xf32> to vector<64x1xf32>
      %25 = math.sqrt %24 : vector<64x1xf32>
      %cst_14 = arith.constant 1.000000e-07 : f32
      %26 = vector.broadcast %cst_14 : f32 to vector<64x1xf32>
      %27 = arith.addf %25, %26 : vector<64x1xf32>
      %28 = tpu.reciprocal %27 : vector<64x1xf32> -> vector<64x1xf32>
      %29 = vector.broadcast %28 : vector<64x1xf32> to vector<64x8xf32>
      %30 = arith.mulf %21, %29 : vector<64x8xf32>
      %31 = vector.shape_cast %30 : vector<64x8xf32> to vector<1x64x8xf32>
      %c0_15 = arith.constant 0 : index
      %c0_16 = arith.constant 0 : index
      %c0_17 = arith.constant 0 : index
      %32 = vector.load %arg4[%c0_15, %c0_16, %c0_17] : memref<1x64x8xf32, #tpu.memory_space<vmem>>, vector<1x64x8xf32>
      tpu.vector_store %arg4[%c0_15, %c0_16, %c0_17], %31 {strides = array<i32>} : memref<1x64x8xf32, #tpu.memory_space<vmem>>, vector<1x64x8xf32>,
    } else {
    }
    return
  }
  func.func @transform_0(%arg0: i32, %arg1: i32) -> (i32, i32) {
    %c0_i32 = arith.constant 0 : i32
    %c0_i32_0 = arith.constant 0 : i32
    %c0_i32_1 = arith.constant 0 : i32
    return %c0_i32, %c0_i32_0 : i32, i32
  }
  func.func @transform_1(%arg0: i32, %arg1: i32) -> (i32, i32, i32) {
    %c0_i32 = arith.constant 0 : i32
    %c0_i32_0 = arith.constant 0 : i32
    return %arg0, %c0_i32, %arg1 : i32, i32, i32
  }
  func.func @transform_2(%arg0: i32, %arg1: i32) -> (i32, i32, i32) {
    %c0_i32 = arith.constant 0 : i32
    %c0_i32_0 = arith.constant 0 : i32
    %c0_i32_1 = arith.constant 0 : i32
    return %arg0, %c0_i32, %c0_i32_0 : i32, i32, i32
  }
}

</mosaic_0001>

<llo_original>
// kernel: _forward_impl.2
$region0: #{_forward_impl.2}
  #allocation0 [shape = 'u32[]', space=smem, size = 0x4, offset = 0x4, fixed_abs, tag = 'smem constant byte address 0x4 - core index']
  #allocation1 [shape = 'u32[144,128]{1,0:T(1,128)}', space=vmem, size = 0x12000, scoped, tag = 'internal scratch']
  #allocation2 [shape = 'f32[64,4]{1,0:T(8,128)}', space=vmem, size = 0x8000, scoped, tag = 'scratch operand']
  %s0 = inlined_call_operand.vmem [shape: s32[64,1], index: 0, kind: input, shape index: {}]
  %s1 = inlined_call_operand.vmem [shape: f32[2,4,256], index: 1, kind: input, shape index: {}]
  %s2 = inlined_call_operand.vmem [shape: f32[2,64,4], index: 2, kind: output, shape index: {}]
  %s3 = sld [smem:[#allocation0]]
  $region49: #{_forward_impl.2} parent=0
    _
  %s5 = ssub.s32 1, %s3
  %s6 = scalar_select 0, %s5, %s3
  loop: start=0, step=1, limit=4
  $region2: #{_forward_impl.2} parent=0 // loop_pre_header
    _
  $region3: #{_forward_impl.2} parent=0 // loop_header
    %s8 = sphi 0, %s12
    %p9 = scmp.ge.s32.totalorder %s8, 4
    %s15 = sphi 0, %s27
    %s16 = sphi 0, %s23
    %s17 = sphi 0, %s15
    %s18 = sphi 0, %s16
    %s19 = sphi 0, %s17
    %s20 = sphi 0, %s18
    %s28 = sphi 0, %s28
    %s30 = sphi 0, %s28
    %s31 = sphi 0, %s30
    %s45 = sphi 0, %s31
    %s53 = sphi 0, %s55
    %s56 = sphi 0, %s53
    %s57 = sphi 0, %s56
    %s73 = sphi 0, %s57
    %s79 = sphi 0, %s81
    %s82 = sphi 0, %s79
    %s83 = sphi 0, %s82
    %s99 = sphi 0, %s83
  $region4: #{_forward_impl.2} parent=0 // loop_header_branch
    %11 = sbr.rel (%p9) target = $region8
  $region5: #{_forward_impl.2} parent=0 // loop_body
    %s13 = ssub.s32 %s8, 1
    %s14 = ssub.s32 %s8, 2
    %s21 = sadd.s32 1, %s16
    %p22 = scmp.ge.s32.totalorder %s21, 1
    %s23 = scalar_select %p22, 0, %s21
    %s24 = sadd.s32 1, %s15
    %s25 = scalar_select %p22, %s24, %s15
    %p26 = scmp.ge.s32.totalorder %s25, 2
    %s27 = scalar_select %p26, 0, %s25
    %s29 = sadd.s32 %s28, 1
    %p32 = scmp.eq.s32.totalorder %s8, 1
    %p33 = scmp.ne.s32.totalorder %s28, %s30
    %p34 = scmp.eq.s32.totalorder %s8, 0
    %p35 = por %p33, %p34
    %p36 = scmp.ne.s32.totalorder %s28, %s30
    %p37 = scmp.eq.s32.totalorder %s13, 1
    %p38 = por %p36, %p37
    %p39 = scmp.ne.s32.totalorder %s30, %s31
    %p40 = scmp.eq.s32.totalorder %s13, 0
    %p41 = por %p39, %p40
    %p42 = scmp.ne.s32.totalorder %s30, %s31
    %p43 = scmp.eq.s32.totalorder %s14, 1
    %p44 = por %p42, %p43
    %p46 = scmp.ne.s32.totalorder %s31, %s45
    %p47 = scmp.eq.s32.totalorder %s14, 0
    %p48 = por %p46, %p47
    %s49 = ssub.s32 %s15, %s27
    %s50 = ssub.s32 %s16, %s23
    %s51 = sor.u32 %s49, %s50
    %p52 = scmp.eq.s32.totalorder %s51, 0
    %s54 = sadd.s32 %s53, 1
    %s55 = scalar_select %p52, %s53, %s54
    %p58 = pneg %p52
    %p59 = scmp.eq.s32.totalorder %s8, 1
    %p60 = por %p58, %p59
    %p61 = scmp.ne.s32.totalorder %s53, %s56
    %p62 = scmp.eq.s32.totalorder %s8, 0
    %p63 = por %p61, %p62
    %p64 = scmp.ne.s32.totalorder %s53, %s56
    %p65 = scmp.eq.s32.totalorder %s13, 1
    %p66 = por %p64, %p65
    %p67 = scmp.ne.s32.totalorder %s56, %s57
    %p68 = scmp.eq.s32.totalorder %s13, 0
    %p69 = por %p67, %p68
    %p70 = scmp.ne.s32.totalorder %s56, %s57
    %p71 = scmp.eq.s32.totalorder %s14, 1
    %p72 = por %p70, %p71
    %p74 = scmp.ne.s32.totalorder %s57, %s73
    %p75 = scmp.eq.s32.totalorder %s14, 0
    %p76 = por %p74, %p75
    %s77 = ssub.s32 %s15, %s27
    %p78 = scmp.eq.s32.totalorder %s77, 0
    %s80 = sadd.s32 %s79, 1
    %s81 = scalar_select %p78, %s79, %s80
    %p84 = pneg %p78
    %p85 = scmp.eq.s32.totalorder %s8, 1
    %p86 = por %p84, %p85
    %p87 = scmp.ne.s32.totalorder %s79, %s82
    %p88 = scmp.eq.s32.totalorder %s8, 0
    %p89 = por %p87, %p88
    %p90 = scmp.ne.s32.totalorder %s79, %s82
    %p91 = scmp.eq.s32.totalorder %s13, 1
    %p92 = por %p90, %p91
    %p93 = scmp.ne.s32.totalorder %s82, %s83
    %p94 = scmp.eq.s32.totalorder %s13, 0
    %p95 = por %p93, %p94
    %p96 = scmp.ne.s32.totalorder %s82, %s83
    %p97 = scmp.eq.s32.totalorder %s14, 1
    %p98 = por %p96, %p97
    %p100 = scmp.ne.s32.totalorder %s83, %s99
    %p101 = scmp.eq.s32.totalorder %s14, 0
    %p102 = por %p100, %p101
    %p103 = scmp.le.s32.totalorder 1, %s8
    %p104 = scmp.lt.s32.totalorder %s8, 3
    %p105 = pnand %p103, %p104
    %p106 = pneg %p105
    // Predicated region
    $region9: #{_forward_impl.2} parent=5 // pred_check
      _
    $region10: #{_forward_impl.2} parent=5 // pred_check_branch
      %108 = sbr.rel (%p105) target = $region12
    $region11: #{_forward_impl.2} parent=5 // pred_region
      %s109 = ssub.s32 %s8, 1
      // Predicated region
      $region13: #{_forward_impl.2} parent=11 // pred_check
        %p110 = pneg %p41
      $region14: #{_forward_impl.2} parent=11 // pred_check_branch
        %112 = sbr.rel (%p110) target = $region16
      $region15: #{_forward_impl.2} parent=11 // pred_region
        _
      $region16: #{_forward_impl.2} parent=11 // pred_fallthru
        _
    $region12: #{_forward_impl.2} parent=5 // pred_fallthru
      _
    %p113 = scmp.lt.s32.totalorder %s8, 2
    // Predicated region
    $region17: #{_forward_impl.2} parent=5 // pred_check
      %p114 = pneg %p113
    $region18: #{_forward_impl.2} parent=5 // pred_check_branch
      %116 = sbr.rel (%p114) target = $region20
    $region19: #{_forward_impl.2} parent=5 // pred_region
      // Predicated region
      $region21: #{_forward_impl.2} parent=19 // pred_check
        %p117 = pneg %p63
      $region22: #{_forward_impl.2} parent=19 // pred_check_branch
        %119 = sbr.rel (%p117) target = $region24
      $region23: #{_forward_impl.2} parent=19 // pred_region
        %s120 = smul.u32 2, %s16
        %p121 = scmp.lt.s32.totalorder %s15, 1
        %s122 = scalar_select %p121, %s15, 1
        %p123 = scmp.lt.s32.totalorder %s120, 1
        %s124 = scalar_select %p123, %s120, 1
        %s125 = smul.addr %s122, 2
        %s126 = sadd.s32 %s124, %s125
        %s127 = smul.addr %s126, 4
        %s128 = scalar_lea.vmem %s1, %s127
        %s129 = smul.u32 2, %s16
      $region24: #{_forward_impl.2} parent=19 // pred_fallthru
        _
    $region20: #{_forward_impl.2} parent=5 // pred_fallthru
      _
    %p130 = scmp.le.s32.totalorder 1, %s8
    %p131 = scmp.lt.s32.totalorder %s8, 3
    %p132 = pnand %p130, %p131
    %p133 = pneg %p132
    // Predicated region
    $region25: #{_forward_impl.2} parent=5 // pred_check
      _
    $region26: #{_forward_impl.2} parent=5 // pred_check_branch
      %135 = sbr.rel (%p132) target = $region28
    $region27: #{_forward_impl.2} parent=5 // pred_region
      %s136 = ssub.s32 %s8, 1
      %p137 = pneg %p41
      %p138 = pneg %p38
      %s139 = smul.u32 2, %s18
      %p140 = scmp.lt.s32.totalorder %s17, 1
      %s141 = scalar_select %p140, %s17, 1
      %p142 = scmp.lt.s32.totalorder %s139, 1
      %s143 = scalar_select %p142, %s139, 1
      %s144 = smul.addr %s141, 2
      %s145 = sadd.s32 %s143, %s144
      %s146 = smul.addr %s145, 4
      %s147 = scalar_lea.vmem %s1, %s146
      %p148 = pneg %p69
      %p149 = pneg %p66
      %p150 = pneg %p95
      %p151 = pneg %p92
      %p152 = scmp.lt.s32.totalorder %s17, 1
      %s153 = scalar_select %p152, %s17, 1
      %s154 = smul.addr %s153, 8
      %s155 = smul.addr %s154, 8
      %s156 = scalar_lea.vmem %s2, %s155
      %s157 = smul.u32 2, %s18
      %p158 = scmp.lt.s32.totalorder %s17, 1
      %s159 = scalar_select %p158, %s17, 1
      %p160 = scmp.lt.s32.totalorder %s157, 1
      %s161 = scalar_select %p160, %s157, 1
      %s162 = smul.addr %s159, 2
      %s163 = sadd.s32 %s161, %s162
      %s164 = smul.addr %s163, 4
      %s165 = scalar_lea.vmem %s1, %s164
      %s166 = smul.u32 2, %s18
      %p167 = scmp.lt.s32.totalorder %s17, 1
      %s168 = scalar_select %p167, %s17, 1
      %s169 = smul.addr %s168, 8
      %s170 = smul.addr %s169, 8
      %s171 = scalar_lea.vmem %s2, %s170
      %p172 = scmp.eq.s32.totalorder %s18, 0
      // Predicated region
      $region29: #{_forward_impl.2} parent=27 // pred_check
        %p173 = pneg %p172
      $region30: #{_forward_impl.2} parent=27 // pred_check_branch
        %175 = sbr.rel (%p173) target = $region32
      $region31: #{_forward_impl.2} parent=27 // pred_region
        %vm176 = vcmask 31744
        %177 = vst.msk [vmem:[#allocation2] sm:$0xff] %vm176, 0.0
        %178 = vst.msk [vmem:[#allocation2 + $0x8] sm:$0xff] %vm176, 0.0
        %179 = vst.msk [vmem:[#allocation2 + $0x10] sm:$0xff] %vm176, 0.0
        %180 = vst.msk [vmem:[#allocation2 + $0x18] sm:$0xff] %vm176, 0.0
        %181 = vst.msk [vmem:[#allocation2 + $0x20] sm:$0xff] %vm176, 0.0
        %182 = vst.msk [vmem:[#allocation2 + $0x28] sm:$0xff] %vm176, 0.0
        %183 = vst.msk [vmem:[#allocation2 + $0x30] sm:$0xff] %vm176, 0.0
        %184 = vst.msk [vmem:[#allocation2 + $0x38] sm:$0xff] %vm176, 0.0
      $region32: #{_forward_impl.2} parent=27 // pred_fallthru
        _
      %v185 = vld [vmem:[%s165] sm:$0xff]
      %v186 = vld [vmem:[%s0] sm:$0xff]
      %v187 = vld [vmem:[%s0 + $0x8] sm:$0xff]
      %v188 = vld [vmem:[%s0 + $0x10] sm:$0xff]
      %v189 = vld [vmem:[%s0 + $0x18] sm:$0xff]
      %v190 = vld [vmem:[%s0 + $0x20] sm:$0xff]
      %v191 = vld [vmem:[%s0 + $0x28] sm:$0xff]
      %v192 = vld [vmem:[%s0 + $0x30] sm:$0xff]
      %v193 = vld [vmem:[%s0 + $0x38] sm:$0xff]
      %s194 = smul.u32 %s18, 256
      %v195 = vstv %s194
      %v196 = vsub.s32 %v186, %v195
      %v197 = vsub.s32 %v187, %v195
      %v198 = vsub.s32 %v188, %v195
      %v199 = vsub.s32 %v189, %v195
      %v200 = vsub.s32 %v190, %v195
      %v201 = vsub.s32 %v191, %v195
      %v202 = vsub.s32 %v192, %v195
      %v203 = vsub.s32 %v193, %v195
      %v204 = vlaneseq
      %v205 = vand.u32 %v204, 127
      %v206 = vadd.s32 %v205, 128
      %207 = vset.pattern.permute.xlu0 0
      %208 = vperm.xlu0 %207, %v196
      %v209 = vpop.permute.xlu0 %208
      %210 = vset.pattern.permute.xlu0 0
      %211 = vperm.xlu0 %210, %v197
      %v212 = vpop.permute.xlu0 %211
      %213 = vset.pattern.permute.xlu0 0
      %214 = vperm.xlu0 %213, %v198
      %v215 = vpop.permute.xlu0 %214
      %216 = vset.pattern.permute.xlu0 0
      %217 = vperm.xlu0 %216, %v199
      %v218 = vpop.permute.xlu0 %217
      %219 = vset.pattern.permute.xlu0 0
      %220 = vperm.xlu0 %219, %v200
      %v221 = vpop.permute.xlu0 %220
      %222 = vset.pattern.permute.xlu0 0
      %223 = vperm.xlu0 %222, %v201
      %v224 = vpop.permute.xlu0 %223
      %225 = vset.pattern.permute.xlu0 0
      %226 = vperm.xlu0 %225, %v202
      %v227 = vpop.permute.xlu0 %226
      %228 = vset.pattern.permute.xlu0 0
      %229 = vperm.xlu0 %228, %v203
      %v230 = vpop.permute.xlu0 %229
      %vm231 = vcmp.eq.s32.totalorder %v205, %v209
      %vm232 = vcmp.eq.s32.totalorder %v206, %v209
      %vm233 = vcmp.eq.s32.totalorder %v205, %v212
      %vm234 = vcmp.eq.s32.totalorder %v206, %v212
      %vm235 = vcmp.eq.s32.totalorder %v205, %v215
      %vm236 = vcmp.eq.s32.totalorder %v206, %v215
      %vm237 = vcmp.eq.s32.totalorder %v205, %v218
      %vm238 = vcmp.eq.s32.totalorder %v206, %v218
      %vm239 = vcmp.eq.s32.totalorder %v205, %v221
      %vm240 = vcmp.eq.s32.totalorder %v206, %v221
      %vm241 = vcmp.eq.s32.totalorder %v205, %v224
      %vm242 = vcmp.eq.s32.totalorder %v206, %v224
      %vm243 = vcmp.eq.s32.totalorder %v205, %v227
      %vm244 = vcmp.eq.s32.totalorder %v206, %v227
      %vm245 = vcmp.eq.s32.totalorder %v205, %v230
      %vm246 = vcmp.eq.s32.totalorder %v206, %v230
      %v247 = vsel %vm231, 1, 0
      %v248 = vsel %vm232, 1, 0
      %v249 = vsel %vm233, 1, 0
      %v250 = vsel %vm234, 1, 0
      %v251 = vsel %vm235, 1, 0
      %v252 = vsel %vm236, 1, 0
      %v253 = vsel %vm237, 1, 0
      %v254 = vsel %vm238, 1, 0
      %v255 = vsel %vm239, 1, 0
      %v256 = vsel %vm240, 1, 0
      %v257 = vsel %vm241, 1, 0
      %v258 = vsel %vm242, 1, 0
      %v259 = vsel %vm243, 1, 0
      %v260 = vsel %vm244, 1, 0
      %v261 = vsel %vm245, 1, 0
      %v262 = vsel %vm246, 1, 0
      %v263 = vcvt.s32.f32 %v247
      %v264 = vcvt.s32.f32 %v248
      %v265 = vcvt.s32.f32 %v249
      %v266 = vcvt.s32.f32 %v250
      %v267 = vcvt.s32.f32 %v251
      %v268 = vcvt.s32.f32 %v252
      %v269 = vcvt.s32.f32 %v253
      %v270 = vcvt.s32.f32 %v254
      %v271 = vcvt.s32.f32 %v255
      %v272 = vcvt.s32.f32 %v256
      %v273 = vcvt.s32.f32 %v257
      %v274 = vcvt.s32.f32 %v258
      %v275 = vcvt.s32.f32 %v259
      %v276 = vcvt.s32.f32 %v260
      %v277 = vcvt.s32.f32 %v261
      %v278 = vcvt.s32.f32 %v262
      %v279 = vld [vmem:[#allocation2] sm:$0xff]
      %v280 = vld [vmem:[#allocation2 + $0x8] sm:$0xff]
      %v281 = vld [vmem:[#allocation2 + $0x10] sm:$0xff]
      %v282 = vld [vmem:[#allocation2 + $0x18] sm:$0xff]
      %v283 = vld [vmem:[#allocation2 + $0x20] sm:$0xff]
      %v284 = vld [vmem:[#allocation2 + $0x28] sm:$0xff]
      %v285 = vld [vmem:[#allocation2 + $0x30] sm:$0xff]
      %v286 = vld [vmem:[#allocation2 + $0x38] sm:$0xff]
      %v288 = vcombine.high %v185, %v185
      %v290 = vand.u32 %v288, 4294901760
      %291 = vmatprep.subr.mxu0 %v290
      %v292 = vand.u32 %v185, 4294901760
      %293 = vmatpush1.xpose.msra.mxu0 %v292
      %294 = vmatprep.subr.mxu0 0.0
      %295 = vmatpush1.xpose.msra.mxu0 0.0
      %296 = vmatprep.subr.mxu0 0.0
      %297 = vmatpush1.xpose.msra.mxu0 0.0
      %298 = vmatprep.subr.mxu0 0.0
      %299 = vmatpush1.xpose.msra.mxu0 0.0
      %300 = vmatprep.subr.mxu0 0.0
      %301 = vmatpush1.xpose.msra.mxu0 0.0
      %302 = vmatprep.subr.mxu0 0.0
      %303 = vmatpush1.xpose.msra.mxu0 0.0
      %304 = vmatprep.subr.mxu0 0.0
      %305 = vmatpush1.xpose.msra.mxu0 0.0
      %306 = vmatprep.subr.mxu0 0.0
      %307 = vmatpush1.xpose.msra.mxu0 0.0
      %308 = vmatprep.subr.mxu0 0.0
      %309 = vmatpush1.xpose.msra.mxu0 0.0
      %310 = vmatprep.subr.mxu0 0.0
      %311 = vmatpush1.xpose.msra.mxu0 0.0
      %312 = vmatprep.subr.mxu0 0.0
      %313 = vmatpush1.xpose.msra.mxu0 0.0
      %314 = vmatprep.subr.mxu0 0.0
      %315 = vmatpush1.xpose.msra.mxu0 0.0
      %316 = vmatprep.subr.mxu0 0.0
      %317 = vmatpush1.xpose.msra.mxu0 0.0
      %318 = vmatprep.subr.mxu0 0.0
      %319 = vmatpush1.xpose.msra.mxu0 0.0
      %320 = vmatprep.subr.mxu0 0.0
      %321 = vmatpush1.xpose.msra.mxu0 0.0
      %322 = vmatprep.subr.mxu0 0.0
      %323 = vmatpush1.xpose.msra.mxu0 0.0
      %324 = vmatprep.subr.mxu0 0.0
      %325 = vmatpush1.xpose.msra.mxu0 0.0
      %326 = vmatprep.subr.mxu0 0.0
      %327 = vmatpush1.xpose.msra.mxu0 0.0
      %328 = vmatprep.subr.mxu0 0.0
      %329 = vmatpush1.xpose.msra.mxu0 0.0
      %330 = vmatprep.subr.mxu0 0.0
      %331 = vmatpush1.xpose.msra.mxu0 0.0
      %332 = vmatprep.subr.mxu0 0.0
      %333 = vmatpush1.xpose.msra.mxu0 0.0
      %334 = vmatprep.subr.mxu0 0.0
      %335 = vmatpush1.xpose.msra.mxu0 0.0
      %336 = vmatprep.subr.mxu0 0.0
      %337 = vmatpush1.xpose.msra.mxu0 0.0
      %338 = vmatprep.subr.mxu0 0.0
      %339 = vmatpush1.xpose.msra.mxu0 0.0
      %340 = vmatprep.subr.mxu0 0.0
      %341 = vmatpush1.xpose.msra.mxu0 0.0
      %342 = vmatprep.subr.mxu0 0.0
      %343 = vmatpush1.xpose.msra.mxu0 0.0
      %344 = vmatprep.subr.mxu0 0.0
      %345 = vmatpush1.xpose.msra.mxu0 0.0
      %346 = vmatprep.subr.mxu0 0.0
      %347 = vmatpush1.xpose.msra.mxu0 0.0
      %348 = vmatprep.subr.mxu0 0.0
      %349 = vmatpush1.xpose.msra.mxu0 0.0
      %350 = vmatprep.subr.mxu0 0.0
      %351 = vmatpush1.xpose.msra.mxu0 0.0
      %352 = vmatprep.subr.mxu0 0.0
      %353 = vmatpush1.xpose.msra.mxu0 0.0
      %354 = vmatprep.subr.mxu0 0.0
      %355 = vmatpush1.xpose.msra.mxu0 0.0
      %v356 = vand.u32 %v264, 4294901760
      %v357 = vsub.f32 %v264, %v356
      %v358 = vand.u32 %v357, 4294901760
      %v359 = vsub.f32 %v357, %v358
      %v360 = vand.u32 %v359, 4294901760
      %361 = vmatprep.mubr.f32.mxu0 %v360
      %v362 = vand.u32 %v263, 4294901760
      %v363 = vsub.f32 %v263, %v362
      %v364 = vand.u32 %v363, 4294901760
      %v365 = vsub.f32 %v363, %v364
      %v366 = vand.u32 %v365, 4294901760
      %367 = vmatmul.mubr.f32.gmra.mrb[0].mxu0 %v366
      %v368 = vpop.f32.mrb[0].mxu0
      %v369 = vadd.f32 0.0, %v368
      %v370 = vpop.f32.mrb[0].mxu0
      %v371 = vand.u32 %v266, 4294901760
      %v372 = vsub.f32 %v266, %v371
      %v373 = vand.u32 %v372, 4294901760
      %v374 = vsub.f32 %v372, %v373
      %v375 = vand.u32 %v374, 4294901760
      %376 = vmatprep.mubr.f32.mxu0 %v375
      %v377 = vand.u32 %v265, 4294901760
      %v378 = vsub.f32 %v265, %v377
      %v379 = vand.u32 %v378, 4294901760
      %v380 = vsub.f32 %v378, %v379
      %v381 = vand.u32 %v380, 4294901760
      %382 = vmatmul.mubr.f32.gmra.mrb[0].mxu0 %v381
      %v383 = vpop.f32.mrb[0].mxu0
      %v384 = vadd.f32 0.0, %v383
      %v385 = vpop.f32.mrb[0].mxu0
      %v386 = vand.u32 %v268, 4294901760
      %v387 = vsub.f32 %v268, %v386
      %v388 = vand.u32 %v387, 4294901760
      %v389 = vsub.f32 %v387, %v388
      %v390 = vand.u32 %v389, 4294901760
      %391 = vmatprep.mubr.f32.mxu0 %v390
      %v392 = vand.u32 %v267, 4294901760
      %v393 = vsub.f32 %v267, %v392
      %v394 = vand.u32 %v393, 4294901760
      %v395 = vsub.f32 %v393, %v394
      %v396 = vand.u32 %v395, 4294901760
      %397 = vmatmul.mubr.f32.gmra.mrb[0].mxu0 %v396
      %v398 = vpop.f32.mrb[0].mxu0
      %v399 = vadd.f32 0.0, %v398
      %v400 = vpop.f32.mrb[0].mxu0
      %v401 = vand.u32 %v270, 4294901760
      %v402 = vsub.f32 %v270, %v401
      %v403 = vand.u32 %v402, 4294901760
      %v404 = vsub.f32 %v402, %v403
      %v405 = vand.u32 %v404, 4294901760
      %406 = vmatprep.mubr.f32.mxu0 %v405
      %v407 = vand.u32 %v269, 4294901760
      %v408 = vsub.f32 %v269, %v407
      %v409 = vand.u32 %v408, 4294901760
      %v410 = vsub.f32 %v408, %v409
      %v411 = vand.u32 %v410, 4294901760
      %412 = vmatmul.mubr.f32.gmra.mrb[0].mxu0 %v411
      %v413 = vpop.f32.mrb[0].mxu0
      %v414 = vadd.f32 0.0, %v413
      %v415 = vpop.f32.mrb[0].mxu0
      %v416 = vand.u32 %v272, 4294901760
      %v417 = vsub.f32 %v272, %v416
      %v418 = vand.u32 %v417, 4294901760
      %v419 = vsub.f32 %v417, %v418
      %v420 = vand.u32 %v419, 4294901760
      %421 = vmatprep.mubr.f32.mxu0 %v420
      %v422 = vand.u32 %v271, 4294901760
      %v423 = vsub.f32 %v271, %v422
      %v424 = vand.u32 %v423, 4294901760
      %v425 = vsub.f32 %v423, %v424
      %v426 = vand.u32 %v425, 4294901760
      %427 = vmatmul.mubr.f32.gmra.mrb[0].mxu0 %v426
      %v428 = vpop.f32.mrb[0].mxu0
      %v429 = vadd.f32 0.0, %v428
      %v430 = vpop.f32.mrb[0].mxu0
      %v431 = vand.u32 %v274, 4294901760
      %v432 = vsub.f32 %v274, %v431
      %v433 = vand.u32 %v432, 4294901760
      %v434 = vsub.f32 %v432, %v433
      %v435 = vand.u32 %v434, 4294901760
      %436 = vmatprep.mubr.f32.mxu0 %v435
      %v437 = vand.u32 %v273, 4294901760
      %v438 = vsub.f32 %v273, %v437
      %v439 = vand.u32 %v438, 4294901760
      %v440 = vsub.f32 %v438, %v439
      %v441 = vand.u32 %v440, 4294901760
      %442 = vmatmul.mubr.f32.gmra.mrb[0].mxu0 %v441
      %v443 = vpop.f32.mrb[0].mxu0
      %v444 = vadd.f32 0.0, %v443
      %v445 = vpop.f32.mrb[0].mxu0
      %v446 = vand.u32 %v276, 4294901760
      %v447 = vsub.f32 %v276, %v446
      %v448 = vand.u32 %v447, 4294901760
      %v449 = vsub.f32 %v447, %v448
      %v450 = vand.u32 %v449, 4294901760
      %451 = vmatprep.mubr.f32.mxu0 %v450
      %v452 = vand.u32 %v275, 4294901760
      %v453 = vsub.f32 %v275, %v452
      %v454 = vand.u32 %v453, 4294901760
      %v455 = vsub.f32 %v453, %v454
      %v456 = vand.u32 %v455, 4294901760
      %457 = vmatmul.mubr.f32.gmra.mrb[0].mxu0 %v456
      %v458 = vpop.f32.mrb[0].mxu0
      %v459 = vadd.f32 0.0, %v458
      %v460 = vpop.f32.mrb[0].mxu0
      %v461 = vand.u32 %v278, 4294901760
      %v462 = vsub.f32 %v278, %v461
      %v463 = vand.u32 %v462, 4294901760
      %v464 = vsub.f32 %v462, %v463
      %v465 = vand.u32 %v464, 4294901760
      %466 = vmatprep.mubr.f32.mxu0 %v465
      %v467 = vand.u32 %v277, 4294901760
      %v468 = vsub.f32 %v277, %v467
      %v469 = vand.u32 %v468, 4294901760
      %v470 = vsub.f32 %v468, %v469
      %v471 = vand.u32 %v470, 4294901760
      %472 = vmatmul.mubr.f32.gmra.mrb[0].mxu0 %v471
      %v473 = vpop.f32.mrb[0].mxu0
      %v474 = vadd.f32 0.0, %v473
      %v475 = vpop.f32.mrb[0].mxu0
      %476 = vdwg.mxu0
      %v477 = vand.u32 %v288, 4294901760
      %v478 = vsub.f32 %v288, %v477
      %v479 = vand.u32 %v478, 4294901760
      %v480 = vsub.f32 %v478, %v479
      %v481 = vand.u32 %v480, 4294901760
      %482 = vmatprep.subr.mxu0 %v481
      %v483 = vand.u32 %v185, 4294901760
      %v484 = vsub.f32 %v185, %v483
      %v485 = vand.u32 %v484, 4294901760
      %v486 = vsub.f32 %v484, %v485
      %v487 = vand.u32 %v486, 4294901760
      %488 = vmatpush1.xpose.msra.mxu0 %v487
      %489 = vmatprep.subr.mxu0 0.0
      %490 = vmatpush1.xpose.msra.mxu0 0.0
      %491 = vmatprep.subr.mxu0 0.0
      %492 = vmatpush1.xpose.msra.mxu0 0.0
      %493 = vmatprep.subr.mxu0 0.0
      %494 = vmatpush1.xpose.msra.mxu0 0.0
      %495 = vmatprep.subr.mxu0 0.0
      %496 = vmatpush1.xpose.msra.mxu0 0.0
      %497 = vmatprep.subr.mxu0 0.0
      %498 = vmatpush1.xpose.msra.mxu0 0.0
      %499 = vmatprep.subr.mxu0 0.0
      %500 = vmatpush1.xpose.msra.mxu0 0.0
      %501 = vmatprep.subr.mxu0 0.0
      %502 = vmatpush1.xpose.msra.mxu0 0.0
      %503 = vmatprep.subr.mxu0 0.0
      %504 = vmatpush1.xpose.msra.mxu0 0.0
      %505 = vmatprep.subr.mxu0 0.0
      %506 = vmatpush1.xpose.msra.mxu0 0.0
      %507 = vmatprep.subr.mxu0 0.0
      %508 = vmatpush1.xpose.msra.mxu0 0.0
      %509 = vmatprep.subr.mxu0 0.0
      %510 = vmatpush1.xpose.msra.mxu0 0.0
      %511 = vmatprep.subr.mxu0 0.0
      %512 = vmatpush1.xpose.msra.mxu0 0.0
      %513 = vmatprep.subr.mxu0 0.0
      %514 = vmatpush1.xpose.msra.mxu0 0.0
      %515 = vmatprep.subr.mxu0 0.0
      %516 = vmatpush1.xpose.msra.mxu0 0.0
      %517 = vmatprep.subr.mxu0 0.0
      %518 = vmatpush1.xpose.msra.mxu0 0.0
      %519 = vmatprep.subr.mxu0 0.0
      %520 = vmatpush1.xpose.msra.mxu0 0.0
      %521 = vmatprep.subr.mxu0 0.0
      %522 = vmatpush1.xpose.msra.mxu0 0.0
      %523 = vmatprep.subr.mxu0 0.0
      %524 = vmatpush1.xpose.msra.mxu0 0.0
      %525 = vmatprep.subr.mxu0 0.0
      %526 = vmatpush1.xpose.msra.mxu0 0.0
      %527 = vmatprep.subr.mxu0 0.0
      %528 = vmatpush1.xpose.msra.mxu0 0.0
      %529 = vmatprep.subr.mxu0 0.0
      %530 = vmatpush1.xpose.msra.mxu0 0.0
      %531 = vmatprep.subr.mxu0 0.0
      %532 = vmatpush1.xpose.msra.mxu0 0.0
      %533 = vmatprep.subr.mxu0 0.0
      %534 = vmatpush1.xpose.msra.mxu0 0.0
      %535 = vmatprep.subr.mxu0 0.0
      %536 = vmatpush1.xpose.msra.mxu0 0.0
      %537 = vmatprep.subr.mxu0 0.0
      %538 = vmatpush1.xpose.msra.mxu0 0.0
      %539 = vmatprep.subr.mxu0 0.0
      %540 = vmatpush1.xpose.msra.mxu0 0.0
      %541 = vmatprep.subr.mxu0 0.0
      %542 = vmatpush1.xpose.msra.mxu0 0.0
      %543 = vmatprep.subr.mxu0 0.0
      %544 = vmatpush1.xpose.msra.mxu0 0.0
      %545 = vmatprep.subr.mxu0 0.0
      %546 = vmatpush1.xpose.msra.mxu0 0.0
      %547 = vmatprep.subr.mxu0 0.0
      %548 = vmatpush1.xpose.msra.mxu0 0.0
      %549 = vmatprep.subr.mxu0 0.0
      %550 = vmatpush1.xpose.msra.mxu0 0.0
      %v551 = vand.u32 %v264, 4294901760
      %552 = vmatprep.mubr.f32.mxu0 %v551
      %v553 = vand.u32 %v263, 4294901760
      %554 = vmatmul.mubr.f32.gmra.mrb[0].mxu0 %v553
      %v555 = vpop.f32.mrb[0].mxu0
      %v556 = vadd.f32 %v369, %v555
      %v557 = vpop.f32.mrb[0].mxu0
      %v558 = vand.u32 %v266, 4294901760
      %559 = vmatprep.mubr.f32.mxu0 %v558
      %v560 = vand.u32 %v265, 4294901760
      %561 = vmatmul.mubr.f32.gmra.mrb[0].mxu0 %v560
      %v562 = vpop.f32.mrb[0].mxu0
      %v563 = vadd.f32 %v384, %v562
      %v564 = vpop.f32.mrb[0].mxu0
      %v565 = vand.u32 %v268, 4294901760
      %566 = vmatprep.mubr.f32.mxu0 %v565
      %v567 = vand.u32 %v267, 4294901760
      %568 = vmatmul.mubr.f32.gmra.mrb[0].mxu0 %v567
      %v569 = vpop.f32.mrb[0].mxu0
      %v570 = vadd.f32 %v399, %v569
      %v571 = vpop.f32.mrb[0].mxu0
      %v572 = vand.u32 %v270, 4294901760
      %573 = vmatprep.mubr.f32.mxu0 %v572
      %v574 = vand.u32 %v269, 4294901760
      %575 = vmatmul.mubr.f32.gmra.mrb[0].mxu0 %v574
      %v576 = vpop.f32.mrb[0].mxu0
      %v577 = vadd.f32 %v414, %v576
      %v578 = vpop.f32.mrb[0].mxu0
      %v579 = vand.u32 %v272, 4294901760
      %580 = vmatprep.mubr.f32.mxu0 %v579
      %v581 = vand.u32 %v271, 4294901760
      %582 = vmatmul.mubr.f32.gmra.mrb[0].mxu0 %v581
      %v583 = vpop.f32.mrb[0].mxu0
      %v584 = vadd.f32 %v429, %v583
      %v585 = vpop.f32.mrb[0].mxu0
      %v586 = vand.u32 %v274, 4294901760
      %587 = vmatprep.mubr.f32.mxu0 %v586
      %v588 = vand.u32 %v273, 4294901760
      %589 = vmatmul.mubr.f32.gmra.mrb[0].mxu0 %v588
      %v590 = vpop.f32.mrb[0].mxu0
      %v591 = vadd.f32 %v444, %v590
      %v592 = vpop.f32.mrb[0].mxu0
      %v593 = vand.u32 %v276, 4294901760
      %594 = vmatprep.mubr.f32.mxu0 %v593
      %v595 = vand.u32 %v275, 4294901760
      %596 = vmatmul.mubr.f32.gmra.mrb[0].mxu0 %v595
      %v597 = vpop.f32.mrb[0].mxu0
      %v598 = vadd.f32 %v459, %v597
      %v599 = vpop.f32.mrb[0].mxu0
      %v600 = vand.u32 %v278, 4294901760
      %601 = vmatprep.mubr.f32.mxu0 %v600
      %v602 = vand.u32 %v277, 4294901760
      %603 = vmatmul.mubr.f32.gmra.mrb[0].mxu0 %v602
      %v604 = vpop.f32.mrb[0].mxu0
      %v605 = vadd.f32 %v474, %v604
      %v606 = vpop.f32.mrb[0].mxu0
      %607 = vdwg.mxu0
      %v608 = vand.u32 %v288, 4294901760
      %v609 = vsub.f32 %v288, %v608
      %610 = vmatprep.subr.mxu0 %v609
      %v611 = vand.u32 %v185, 4294901760
      %v612 = vsub.f32 %v185, %v611
      %613 = vmatpush1.xpose.msra.mxu0 %v612
      %614 = vmatprep.subr.mxu0 0.0
      %615 = vmatpush1.xpose.msra.mxu0 0.0
      %616 = vmatprep.subr.mxu0 0.0
      %617 = vmatpush1.xpose.msra.mxu0 0.0
      %618 = vmatprep.subr.mxu0 0.0
      %619 = vmatpush1.xpose.msra.mxu0 0.0
      %620 = vmatprep.subr.mxu0 0.0
      %621 = vmatpush1.xpose.msra.mxu0 0.0
      %622 = vmatprep.subr.mxu0 0.0
      %623 = vmatpush1.xpose.msra.mxu0 0.0
      %624 = vmatprep.subr.mxu0 0.0
      %625 = vmatpush1.xpose.msra.mxu0 0.0
      %626 = vmatprep.subr.mxu0 0.0
      %627 = vmatpush1.xpose.msra.mxu0 0.0
      %628 = vmatprep.subr.mxu0 0.0
      %629 = vmatpush1.xpose.msra.mxu0 0.0
      %630 = vmatprep.subr.mxu0 0.0
      %631 = vmatpush1.xpose.msra.mxu0 0.0
      %632 = vmatprep.subr.mxu0 0.0
      %633 = vmatpush1.xpose.msra.mxu0 0.0
      %634 = vmatprep.subr.mxu0 0.0
      %635 = vmatpush1.xpose.msra.mxu0 0.0
      %636 = vmatprep.subr.mxu0 0.0
      %637 = vmatpush1.xpose.msra.mxu0 0.0
      %638 = vmatprep.subr.mxu0 0.0
      %639 = vmatpush1.xpose.msra.mxu0 0.0
      %640 = vmatprep.subr.mxu0 0.0
      %641 = vmatpush1.xpose.msra.mxu0 0.0
      %642 = vmatprep.subr.mxu0 0.0
      %643 = vmatpush1.xpose.msra.mxu0 0.0
      %644 = vmatprep.subr.mxu0 0.0
      %645 = vmatpush1.xpose.msra.mxu0 0.0
      %646 = vmatprep.subr.mxu0 0.0
      %647 = vmatpush1.xpose.msra.mxu0 0.0
      %648 = vmatprep.subr.mxu0 0.0
      %649 = vmatpush1.xpose.msra.mxu0 0.0
      %650 = vmatprep.subr.mxu0 0.0
      %651 = vmatpush1.xpose.msra.mxu0 0.0
      %652 = vmatprep.subr.mxu0 0.0
      %653 = vmatpush1.xpose.msra.mxu0 0.0
      %654 = vmatprep.subr.mxu0 0.0
      %655 = vmatpush1.xpose.msra.mxu0 0.0
      %656 = vmatprep.subr.mxu0 0.0
      %657 = vmatpush1.xpose.msra.mxu0 0.0
      %658 = vmatprep.subr.mxu0 0.0
      %659 = vmatpush1.xpose.msra.mxu0 0.0
      %660 = vmatprep.subr.mxu0 0.0
      %661 = vmatpush1.xpose.msra.mxu0 0.0
      %662 = vmatprep.subr.mxu0 0.0
      %663 = vmatpush1.xpose.msra.mxu0 0.0
      %664 = vmatprep.subr.mxu0 0.0
      %665 = vmatpush1.xpose.msra.mxu0 0.0
      %666 = vmatprep.subr.mxu0 0.0
      %667 = vmatpush1.xpose.msra.mxu0 0.0
      %668 = vmatprep.subr.mxu0 0.0
      %669 = vmatpush1.xpose.msra.mxu0 0.0
      %670 = vmatprep.subr.mxu0 0.0
      %671 = vmatpush1.xpose.msra.mxu0 0.0
      %672 = vmatprep.subr.mxu0 0.0
      %673 = vmatpush1.xpose.msra.mxu0 0.0
      %674 = vmatprep.subr.mxu0 0.0
      %675 = vmatpush1.xpose.msra.mxu0 0.0
      %v676 = vand.u32 %v264, 4294901760
      %v677 = vsub.f32 %v264, %v676
      %678 = vmatprep.mubr.f32.mxu0 %v677
      %v679 = vand.u32 %v263, 4294901760
      %v680 = vsub.f32 %v263, %v679
      %681 = vmatmul.mubr.f32.gmra.mrb[0].mxu0 %v680
      %v682 = vpop.f32.mrb[0].mxu0
      %v683 = vadd.f32 %v556, %v682
      %v684 = vpop.f32.mrb[0].mxu0
      %v685 = vand.u32 %v266, 4294901760
      %v686 = vsub.f32 %v266, %v685
      %687 = vmatprep.mubr.f32.mxu0 %v686
      %v688 = vand.u32 %v265, 4294901760
      %v689 = vsub.f32 %v265, %v688
      %690 = vmatmul.mubr.f32.gmra.mrb[0].mxu0 %v689
      %v691 = vpop.f32.mrb[0].mxu0
      %v692 = vadd.f32 %v563, %v691
      %v693 = vpop.f32.mrb[0].mxu0
      %v694 = vand.u32 %v268, 4294901760
      %v695 = vsub.f32 %v268, %v694
      %696 = vmatprep.mubr.f32.mxu0 %v695
      %v697 = vand.u32 %v267, 4294901760
      %v698 = vsub.f32 %v267, %v697
      %699 = vmatmul.mubr.f32.gmra.mrb[0].mxu0 %v698
      %v700 = vpop.f32.mrb[0].mxu0
      %v701 = vadd.f32 %v570, %v700
      %v702 = vpop.f32.mrb[0].mxu0
      %v703 = vand.u32 %v270, 4294901760
      %v704 = vsub.f32 %v270, %v703
      %705 = vmatprep.mubr.f32.mxu0 %v704
      %v706 = vand.u32 %v269, 4294901760
      %v707 = vsub.f32 %v269, %v706
      %708 = vmatmul.mubr.f32.gmra.mrb[0].mxu0 %v707
      %v709 = vpop.f32.mrb[0].mxu0
      %v710 = vadd.f32 %v577, %v709
      %v711 = vpop.f32.mrb[0].mxu0
      %v712 = vand.u32 %v272, 4294901760
      %v713 = vsub.f32 %v272, %v712
      %714 = vmatprep.mubr.f32.mxu0 %v713
      %v715 = vand.u32 %v271, 4294901760
      %v716 = vsub.f32 %v271, %v715
      %717 = vmatmul.mubr.f32.gmra.mrb[0].mxu0 %v716
      %v718 = vpop.f32.mrb[0].mxu0
      %v719 = vadd.f32 %v584, %v718
      %v720 = vpop.f32.mrb[0].mxu0
      %v721 = vand.u32 %v274, 4294901760
      %v722 = vsub.f32 %v274, %v721
      %723 = vmatprep.mubr.f32.mxu0 %v722
      %v724 = vand.u32 %v273, 4294901760
      %v725 = vsub.f32 %v273, %v724
      %726 = vmatmul.mubr.f32.gmra.mrb[0].mxu0 %v725
      %v727 = vpop.f32.mrb[0].mxu0
      %v728 = vadd.f32 %v591, %v727
      %v729 = vpop.f32.mrb[0].mxu0
      %v730 = vand.u32 %v276, 4294901760
      %v731 = vsub.f32 %v276, %v730
      %732 = vmatprep.mubr.f32.mxu0 %v731
      %v733 = vand.u32 %v275, 4294901760
      %v734 = vsub.f32 %v275, %v733
      %735 = vmatmul.mubr.f32.gmra.mrb[0].mxu0 %v734
      %v736 = vpop.f32.mrb[0].mxu0
      %v737 = vadd.f32 %v598, %v736
      %v738 = vpop.f32.mrb[0].mxu0
      %v739 = vand.u32 %v278, 4294901760
      %v740 = vsub.f32 %v278, %v739
      %741 = vmatprep.mubr.f32.mxu0 %v740
      %v742 = vand.u32 %v277, 4294901760
      %v743 = vsub.f32 %v277, %v742
      %744 = vmatmul.mubr.f32.gmra.mrb[0].mxu0 %v743
      %v745 = vpop.f32.mrb[0].mxu0
      %v746 = vadd.f32 %v605, %v745
      %v747 = vpop.f32.mrb[0].mxu0
      %748 = vdwg.mxu0
      %v749 = vand.u32 %v288, 4294901760
      %750 = vmatprep.subr.mxu0 %v749
      %v751 = vand.u32 %v185, 4294901760
      %752 = vmatpush1.xpose.msra.mxu0 %v751
      %753 = vmatprep.subr.mxu0 0.0
      %754 = vmatpush1.xpose.msra.mxu0 0.0
      %755 = vmatprep.subr.mxu0 0.0
      %756 = vmatpush1.xpose.msra.mxu0 0.0
      %757 = vmatprep.subr.mxu0 0.0
      %758 = vmatpush1.xpose.msra.mxu0 0.0
      %759 = vmatprep.subr.mxu0 0.0
      %760 = vmatpush1.xpose.msra.mxu0 0.0
      %761 = vmatprep.subr.mxu0 0.0
      %762 = vmatpush1.xpose.msra.mxu0 0.0
      %763 = vmatprep.subr.mxu0 0.0
      %764 = vmatpush1.xpose.msra.mxu0 0.0
      %765 = vmatprep.subr.mxu0 0.0
      %766 = vmatpush1.xpose.msra.mxu0 0.0
      %767 = vmatprep.subr.mxu0 0.0
      %768 = vmatpush1.xpose.msra.mxu0 0.0
      %769 = vmatprep.subr.mxu0 0.0
      %770 = vmatpush1.xpose.msra.mxu0 0.0
      %771 = vmatprep.subr.mxu0 0.0
      %772 = vmatpush1.xpose.msra.mxu0 0.0
      %773 = vmatprep.subr.mxu0 0.0
      %774 = vmatpush1.xpose.msra.mxu0 0.0
      %775 = vmatprep.subr.mxu0 0.0
      %776 = vmatpush1.xpose.msra.mxu0 0.0
      %777 = vmatprep.subr.mxu0 0.0
      %778 = vmatpush1.xpose.msra.mxu0 0.0
      %779 = vmatprep.subr.mxu0 0.0
      %780 = vmatpush1.xpose.msra.mxu0 0.0
      %781 = vmatprep.subr.mxu0 0.0
      %782 = vmatpush1.xpose.msra.mxu0 0.0
      %783 = vmatprep.subr.mxu0 0.0
      %784 = vmatpush1.xpose.msra.mxu0 0.0
      %785 = vmatprep.subr.mxu0 0.0
      %786 = vmatpush1.xpose.msra.mxu0 0.0
      %787 = vmatprep.subr.mxu0 0.0
      %788 = vmatpush1.xpose.msra.mxu0 0.0
      %789 = vmatprep.subr.mxu0 0.0
      %790 = vmatpush1.xpose.msra.mxu0 0.0
      %791 = vmatprep.subr.mxu0 0.0
      %792 = vmatpush1.xpose.msra.mxu0 0.0
      %793 = vmatprep.subr.mxu0 0.0
      %794 = vmatpush1.xpose.msra.mxu0 0.0
      %795 = vmatprep.subr.mxu0 0.0
      %796 = vmatpush1.xpose.msra.mxu0 0.0
      %797 = vmatprep.subr.mxu0 0.0
      %798 = vmatpush1.xpose.msra.mxu0 0.0
      %799 = vmatprep.subr.mxu0 0.0
      %800 = vmatpush1.xpose.msra.mxu0 0.0
      %801 = vmatprep.subr.mxu0 0.0
      %802 = vmatpush1.xpose.msra.mxu0 0.0
      %803 = vmatprep.subr.mxu0 0.0
      %804 = vmatpush1.xpose.msra.mxu0 0.0
      %805 = vmatprep.subr.mxu0 0.0
      %806 = vmatpush1.xpose.msra.mxu0 0.0
      %807 = vmatprep.subr.mxu0 0.0
      %808 = vmatpush1.xpose.msra.mxu0 0.0
      %809 = vmatprep.subr.mxu0 0.0
      %810 = vmatpush1.xpose.msra.mxu0 0.0
      %811 = vmatprep.subr.mxu0 0.0
      %812 = vmatpush1.xpose.msra.mxu0 0.0
      %813 = vmatprep.subr.mxu0 0.0
      %814 = vmatpush1.xpose.msra.mxu0 0.0
      %v815 = vand.u32 %v264, 4294901760
      %v816 = vsub.f32 %v264, %v815
      %v817 = vand.u32 %v816, 4294901760
      %818 = vmatprep.mubr.f32.mxu0 %v817
      %v819 = vand.u32 %v263, 4294901760
      %v820 = vsub.f32 %v263, %v819
      %v821 = vand.u32 %v820, 4294901760
      %822 = vmatmul.mubr.f32.gmra.mrb[0].mxu0 %v821
      %v823 = vpop.f32.mrb[0].mxu0
      %v824 = vadd.f32 %v683, %v823
      %v825 = vpop.f32.mrb[0].mxu0
      %v826 = vand.u32 %v266, 4294901760
      %v827 = vsub.f32 %v266, %v826
      %v828 = vand.u32 %v827, 4294901760
      %829 = vmatprep.mubr.f32.mxu0 %v828
      %v830 = vand.u32 %v265, 4294901760
      %v831 = vsub.f32 %v265, %v830
      %v832 = vand.u32 %v831, 4294901760
      %833 = vmatmul.mubr.f32.gmra.mrb[0].mxu0 %v832
      %v834 = vpop.f32.mrb[0].mxu0
      %v835 = vadd.f32 %v692, %v834
      %v836 = vpop.f32.mrb[0].mxu0
      %v837 = vand.u32 %v268, 4294901760
      %v838 = vsub.f32 %v268, %v837
      %v839 = vand.u32 %v838, 4294901760
      %840 = vmatprep.mubr.f32.mxu0 %v839
      %v841 = vand.u32 %v267, 4294901760
      %v842 = vsub.f32 %v267, %v841
      %v843 = vand.u32 %v842, 4294901760
      %844 = vmatmul.mubr.f32.gmra.mrb[0].mxu0 %v843
      %v845 = vpop.f32.mrb[0].mxu0
      %v846 = vadd.f32 %v701, %v845
      %v847 = vpop.f32.mrb[0].mxu0
      %v848 = vand.u32 %v270, 4294901760
      %v849 = vsub.f32 %v270, %v848
      %v850 = vand.u32 %v849, 4294901760
      %851 = vmatprep.mubr.f32.mxu0 %v850
      %v852 = vand.u32 %v269, 4294901760
      %v853 = vsub.f32 %v269, %v852
      %v854 = vand.u32 %v853, 4294901760
      %855 = vmatmul.mubr.f32.gmra.mrb[0].mxu0 %v854
      %v856 = vpop.f32.mrb[0].mxu0
      %v857 = vadd.f32 %v710, %v856
      %v858 = vpop.f32.mrb[0].mxu0
      %v859 = vand.u32 %v272, 4294901760
      %v860 = vsub.f32 %v272, %v859
      %v861 = vand.u32 %v860, 4294901760
      %862 = vmatprep.mubr.f32.mxu0 %v861
      %v863 = vand.u32 %v271, 4294901760
      %v864 = vsub.f32 %v271, %v863
      %v865 = vand.u32 %v864, 4294901760
      %866 = vmatmul.mubr.f32.gmra.mrb[0].mxu0 %v865
      %v867 = vpop.f32.mrb[0].mxu0
      %v868 = vadd.f32 %v719, %v867
      %v869 = vpop.f32.mrb[0].mxu0
      %v870 = vand.u32 %v274, 4294901760
      %v871 = vsub.f32 %v274, %v870
      %v872 = vand.u32 %v871, 4294901760
      %873 = vmatprep.mubr.f32.mxu0 %v872
      %v874 = vand.u32 %v273, 4294901760
      %v875 = vsub.f32 %v273, %v874
      %v876 = vand.u32 %v875, 4294901760
      %877 = vmatmul.mubr.f32.gmra.mrb[0].mxu0 %v876
      %v878 = vpop.f32.mrb[0].mxu0
      %v879 = vadd.f32 %v728, %v878
      %v880 = vpop.f32.mrb[0].mxu0
      %v881 = vand.u32 %v276, 4294901760
      %v882 = vsub.f32 %v276, %v881
      %v883 = vand.u32 %v882, 4294901760
      %884 = vmatprep.mubr.f32.mxu0 %v883
      %v885 = vand.u32 %v275, 4294901760
      %v886 = vsub.f32 %v275, %v885
      %v887 = vand.u32 %v886, 4294901760
      %888 = vmatmul.mubr.f32.gmra.mrb[0].mxu0 %v887
      %v889 = vpop.f32.mrb[0].mxu0
      %v890 = vadd.f32 %v737, %v889
      %v891 = vpop.f32.mrb[0].mxu0
      %v892 = vand.u32 %v278, 4294901760
      %v893 = vsub.f32 %v278, %v892
      %v894 = vand.u32 %v893, 4294901760
      %895 = vmatprep.mubr.f32.mxu0 %v894
      %v896 = vand.u32 %v277, 4294901760
      %v897 = vsub.f32 %v277, %v896
      %v898 = vand.u32 %v897, 4294901760
      %899 = vmatmul.mubr.f32.gmra.mrb[0].mxu0 %v898
      %v900 = vpop.f32.mrb[0].mxu0
      %v901 = vadd.f32 %v746, %v900
      %v902 = vpop.f32.mrb[0].mxu0
      %903 = vdwg.mxu0
      %v904 = vand.u32 %v288, 4294901760
      %v905 = vsub.f32 %v288, %v904
      %v906 = vand.u32 %v905, 4294901760
      %907 = vmatprep.subr.mxu0 %v906
      %v908 = vand.u32 %v185, 4294901760
      %v909 = vsub.f32 %v185, %v908
      %v910 = vand.u32 %v909, 4294901760
      %911 = vmatpush1.xpose.msra.mxu0 %v910
      %912 = vmatprep.subr.mxu0 0.0
      %913 = vmatpush1.xpose.msra.mxu0 0.0
      %914 = vmatprep.subr.mxu0 0.0
      %915 = vmatpush1.xpose.msra.mxu0 0.0
      %916 = vmatprep.subr.mxu0 0.0
      %917 = vmatpush1.xpose.msra.mxu0 0.0
      %918 = vmatprep.subr.mxu0 0.0
      %919 = vmatpush1.xpose.msra.mxu0 0.0
      %920 = vmatprep.subr.mxu0 0.0
      %921 = vmatpush1.xpose.msra.mxu0 0.0
      %922 = vmatprep.subr.mxu0 0.0
      %923 = vmatpush1.xpose.msra.mxu0 0.0
      %924 = vmatprep.subr.mxu0 0.0
      %925 = vmatpush1.xpose.msra.mxu0 0.0
      %926 = vmatprep.subr.mxu0 0.0
      %927 = vmatpush1.xpose.msra.mxu0 0.0
      %928 = vmatprep.subr.mxu0 0.0
      %929 = vmatpush1.xpose.msra.mxu0 0.0
      %930 = vmatprep.subr.mxu0 0.0
      %931 = vmatpush1.xpose.msra.mxu0 0.0
      %932 = vmatprep.subr.mxu0 0.0
      %933 = vmatpush1.xpose.msra.mxu0 0.0
      %934 = vmatprep.subr.mxu0 0.0
      %935 = vmatpush1.xpose.msra.mxu0 0.0
      %936 = vmatprep.subr.mxu0 0.0
      %937 = vmatpush1.xpose.msra.mxu0 0.0
      %938 = vmatprep.subr.mxu0 0.0
      %939 = vmatpush1.xpose.msra.mxu0 0.0
      %940 = vmatprep.subr.mxu0 0.0
      %941 = vmatpush1.xpose.msra.mxu0 0.0
      %942 = vmatprep.subr.mxu0 0.0
      %943 = vmatpush1.xpose.msra.mxu0 0.0
      %944 = vmatprep.subr.mxu0 0.0
      %945 = vmatpush1.xpose.msra.mxu0 0.0
      %946 = vmatprep.subr.mxu0 0.0
      %947 = vmatpush1.xpose.msra.mxu0 0.0
      %948 = vmatprep.subr.mxu0 0.0
      %949 = vmatpush1.xpose.msra.mxu0 0.0
      %950 = vmatprep.subr.mxu0 0.0
      %951 = vmatpush1.xpose.msra.mxu0 0.0
      %952 = vmatprep.subr.mxu0 0.0
      %953 = vmatpush1.xpose.msra.mxu0 0.0
      %954 = vmatprep.subr.mxu0 0.0
      %955 = vmatpush1.xpose.msra.mxu0 0.0
      %956 = vmatprep.subr.mxu0 0.0
      %957 = vmatpush1.xpose.msra.mxu0 0.0
      %958 = vmatprep.subr.mxu0 0.0
      %959 = vmatpush1.xpose.msra.mxu0 0.0
      %960 = vmatprep.subr.mxu0 0.0
      %961 = vmatpush1.xpose.msra.mxu0 0.0
      %962 = vmatprep.subr.mxu0 0.0
      %963 = vmatpush1.xpose.msra.mxu0 0.0
      %964 = vmatprep.subr.mxu0 0.0
      %965 = vmatpush1.xpose.msra.mxu0 0.0
      %966 = vmatprep.subr.mxu0 0.0
      %967 = vmatpush1.xpose.msra.mxu0 0.0
      %968 = vmatprep.subr.mxu0 0.0
      %969 = vmatpush1.xpose.msra.mxu0 0.0
      %970 = vmatprep.subr.mxu0 0.0
      %971 = vmatpush1.xpose.msra.mxu0 0.0
      %972 = vmatprep.subr.mxu0 0.0
      %973 = vmatpush1.xpose.msra.mxu0 0.0
      %v974 = vand.u32 %v264, 4294901760
      %975 = vmatprep.mubr.f32.mxu0 %v974
      %v976 = vand.u32 %v263, 4294901760
      %977 = vmatmul.mubr.f32.gmra.mrb[0].mxu0 %v976
      %v978 = vpop.f32.mrb[0].mxu0
      %v979 = vadd.f32 %v824, %v978
      %v980 = vpop.f32.mrb[0].mxu0
      %v981 = vand.u32 %v266, 4294901760
      %982 = vmatprep.mubr.f32.mxu0 %v981
      %v983 = vand.u32 %v265, 4294901760
      %984 = vmatmul.mubr.f32.gmra.mrb[0].mxu0 %v983
      %v985 = vpop.f32.mrb[0].mxu0
      %v986 = vadd.f32 %v835, %v985
      %v987 = vpop.f32.mrb[0].mxu0
      %v988 = vand.u32 %v268, 4294901760
      %989 = vmatprep.mubr.f32.mxu0 %v988
      %v990 = vand.u32 %v267, 4294901760
      %991 = vmatmul.mubr.f32.gmra.mrb[0].mxu0 %v990
      %v992 = vpop.f32.mrb[0].mxu0
      %v993 = vadd.f32 %v846, %v992
      %v994 = vpop.f32.mrb[0].mxu0
      %v995 = vand.u32 %v270, 4294901760
      %996 = vmatprep.mubr.f32.mxu0 %v995
      %v997 = vand.u32 %v269, 4294901760
      %998 = vmatmul.mubr.f32.gmra.mrb[0].mxu0 %v997
      %v999 = vpop.f32.mrb[0].mxu0
      %v1000 = vadd.f32 %v857, %v999
      %v1001 = vpop.f32.mrb[0].mxu0
      %v1002 = vand.u32 %v272, 4294901760
      %1003 = vmatprep.mubr.f32.mxu0 %v1002
      %v1004 = vand.u32 %v271, 4294901760
      %1005 = vmatmul.mubr.f32.gmra.mrb[0].mxu0 %v1004
      %v1006 = vpop.f32.mrb[0].mxu0
      %v1007 = vadd.f32 %v868, %v1006
      %v1008 = vpop.f32.mrb[0].mxu0
      %v1009 = vand.u32 %v274, 4294901760
      %1010 = vmatprep.mubr.f32.mxu0 %v1009
      %v1011 = vand.u32 %v273, 4294901760
      %1012 = vmatmul.mubr.f32.gmra.mrb[0].mxu0 %v1011
      %v1013 = vpop.f32.mrb[0].mxu0
      %v1014 = vadd.f32 %v879, %v1013
      %v1015 = vpop.f32.mrb[0].mxu0
      %v1016 = vand.u32 %v276, 4294901760
      %1017 = vmatprep.mubr.f32.mxu0 %v1016
      %v1018 = vand.u32 %v275, 4294901760
      %1019 = vmatmul.mubr.f32.gmra.mrb[0].mxu0 %v1018
      %v1020 = vpop.f32.mrb[0].mxu0
      %v1021 = vadd.f32 %v890, %v1020
      %v1022 = vpop.f32.mrb[0].mxu0
      %v1023 = vand.u32 %v278, 4294901760
      %1024 = vmatprep.mubr.f32.mxu0 %v1023
      %v1025 = vand.u32 %v277, 4294901760
      %1026 = vmatmul.mubr.f32.gmra.mrb[0].mxu0 %v1025
      %v1027 = vpop.f32.mrb[0].mxu0
      %v1028 = vadd.f32 %v901, %v1027
      %v1029 = vpop.f32.mrb[0].mxu0
      %1030 = vdwg.mxu0
      %v1031 = vand.u32 %v288, 4294901760
      %1032 = vmatprep.subr.mxu0 %v1031
      %v1033 = vand.u32 %v185, 4294901760
      %1034 = vmatpush1.xpose.msra.mxu0 %v1033
      %1035 = vmatprep.subr.mxu0 0.0
      %1036 = vmatpush1.xpose.msra.mxu0 0.0
      %1037 = vmatprep.subr.mxu0 0.0
      %1038 = vmatpush1.xpose.msra.mxu0 0.0
      %1039 = vmatprep.subr.mxu0 0.0
      %1040 = vmatpush1.xpose.msra.mxu0 0.0
      %1041 = vmatprep.subr.mxu0 0.0
      %1042 = vmatpush1.xpose.msra.mxu0 0.0
      %1043 = vmatprep.subr.mxu0 0.0
      %1044 = vmatpush1.xpose.msra.mxu0 0.0
      %1045 = vmatprep.subr.mxu0 0.0
      %1046 = vmatpush1.xpose.msra.mxu0 0.0
      %1047 = vmatprep.subr.mxu0 0.0
      %1048 = vmatpush1.xpose.msra.mxu0 0.0
      %1049 = vmatprep.subr.mxu0 0.0
      %1050 = vmatpush1.xpose.msra.mxu0 0.0
      %1051 = vmatprep.subr.mxu0 0.0
      %1052 = vmatpush1.xpose.msra.mxu0 0.0
      %1053 = vmatprep.subr.mxu0 0.0
      %1054 = vmatpush1.xpose.msra.mxu0 0.0
      %1055 = vmatprep.subr.mxu0 0.0
      %1056 = vmatpush1.xpose.msra.mxu0 0.0
      %1057 = vmatprep.subr.mxu0 0.0
      %1058 = vmatpush1.xpose.msra.mxu0 0.0
      %1059 = vmatprep.subr.mxu0 0.0
      %1060 = vmatpush1.xpose.msra.mxu0 0.0
      %1061 = vmatprep.subr.mxu0 0.0
      %1062 = vmatpush1.xpose.msra.mxu0 0.0
      %1063 = vmatprep.subr.mxu0 0.0
      %1064 = vmatpush1.xpose.msra.mxu0 0.0
      %1065 = vmatprep.subr.mxu0 0.0
      %1066 = vmatpush1.xpose.msra.mxu0 0.0
      %1067 = vmatprep.subr.mxu0 0.0
      %1068 = vmatpush1.xpose.msra.mxu0 0.0
      %1069 = vmatprep.subr.mxu0 0.0
      %1070 = vmatpush1.xpose.msra.mxu0 0.0
      %1071 = vmatprep.subr.mxu0 0.0
      %1072 = vmatpush1.xpose.msra.mxu0 0.0
      %1073 = vmatprep.subr.mxu0 0.0
      %1074 = vmatpush1.xpose.msra.mxu0 0.0
      %1075 = vmatprep.subr.mxu0 0.0
      %1076 = vmatpush1.xpose.msra.mxu0 0.0
      %1077 = vmatprep.subr.mxu0 0.0
      %1078 = vmatpush1.xpose.msra.mxu0 0.0
      %1079 = vmatprep.subr.mxu0 0.0
      %1080 = vmatpush1.xpose.msra.mxu0 0.0
      %1081 = vmatprep.subr.mxu0 0.0
      %1082 = vmatpush1.xpose.msra.mxu0 0.0
      %1083 = vmatprep.subr.mxu0 0.0
      %1084 = vmatpush1.xpose.msra.mxu0 0.0
      %1085 = vmatprep.subr.mxu0 0.0
      %1086 = vmatpush1.xpose.msra.mxu0 0.0
      %1087 = vmatprep.subr.mxu0 0.0
      %1088 = vmatpush1.xpose.msra.mxu0 0.0
      %1089 = vmatprep.subr.mxu0 0.0
      %1090 = vmatpush1.xpose.msra.mxu0 0.0
      %1091 = vmatprep.subr.mxu0 0.0
      %1092 = vmatpush1.xpose.msra.mxu0 0.0
      %1093 = vmatprep.subr.mxu0 0.0
      %1094 = vmatpush1.xpose.msra.mxu0 0.0
      %1095 = vmatprep.subr.mxu0 0.0
      %1096 = vmatpush1.xpose.msra.mxu0 0.0
      %v1097 = vand.u32 %v264, 4294901760
      %1098 = vmatprep.mubr.f32.mxu0 %v1097
      %v1099 = vand.u32 %v263, 4294901760
      %1100 = vmatmul.mubr.f32.gmra.mrb[0].mxu0 %v1099
      %v1101 = vpop.f32.mrb[0].mxu0
      %v1102 = vadd.f32 %v979, %v1101
      %v1103 = vpop.f32.mrb[0].mxu0
      %v1104 = vand.u32 %v266, 4294901760
      %1105 = vmatprep.mubr.f32.mxu0 %v1104
      %v1106 = vand.u32 %v265, 4294901760
      %1107 = vmatmul.mubr.f32.gmra.mrb[0].mxu0 %v1106
      %v1108 = vpop.f32.mrb[0].mxu0
      %v1109 = vadd.f32 %v986, %v1108
      %v1110 = vpop.f32.mrb[0].mxu0
      %v1111 = vand.u32 %v268, 4294901760
      %1112 = vmatprep.mubr.f32.mxu0 %v1111
      %v1113 = vand.u32 %v267, 4294901760
      %1114 = vmatmul.mubr.f32.gmra.mrb[0].mxu0 %v1113
      %v1115 = vpop.f32.mrb[0].mxu0
      %v1116 = vadd.f32 %v993, %v1115
      %v1117 = vpop.f32.mrb[0].mxu0
      %v1118 = vand.u32 %v270, 4294901760
      %1119 = vmatprep.mubr.f32.mxu0 %v1118
      %v1120 = vand.u32 %v269, 4294901760
      %1121 = vmatmul.mubr.f32.gmra.mrb[0].mxu0 %v1120
      %v1122 = vpop.f32.mrb[0].mxu0
      %v1123 = vadd.f32 %v1000, %v1122
      %v1124 = vpop.f32.mrb[0].mxu0
      %v1125 = vand.u32 %v272, 4294901760
      %1126 = vmatprep.mubr.f32.mxu0 %v1125
      %v1127 = vand.u32 %v271, 4294901760
      %1128 = vmatmul.mubr.f32.gmra.mrb[0].mxu0 %v1127
      %v1129 = vpop.f32.mrb[0].mxu0
      %v1130 = vadd.f32 %v1007, %v1129
      %v1131 = vpop.f32.mrb[0].mxu0
      %v1132 = vand.u32 %v274, 4294901760
      %1133 = vmatprep.mubr.f32.mxu0 %v1132
      %v1134 = vand.u32 %v273, 4294901760
      %1135 = vmatmul.mubr.f32.gmra.mrb[0].mxu0 %v1134
      %v1136 = vpop.f32.mrb[0].mxu0
      %v1137 = vadd.f32 %v1014, %v1136
      %v1138 = vpop.f32.mrb[0].mxu0
      %v1139 = vand.u32 %v276, 4294901760
      %1140 = vmatprep.mubr.f32.mxu0 %v1139
      %v1141 = vand.u32 %v275, 4294901760
      %1142 = vmatmul.mubr.f32.gmra.mrb[0].mxu0 %v1141
      %v1143 = vpop.f32.mrb[0].mxu0
      %v1144 = vadd.f32 %v1021, %v1143
      %v1145 = vpop.f32.mrb[0].mxu0
      %v1146 = vand.u32 %v278, 4294901760
      %1147 = vmatprep.mubr.f32.mxu0 %v1146
      %v1148 = vand.u32 %v277, 4294901760
      %1149 = vmatmul.mubr.f32.gmra.mrb[0].mxu0 %v1148
      %v1150 = vpop.f32.mrb[0].mxu0
      %v1151 = vadd.f32 %v1028, %v1150
      %v1152 = vpop.f32.mrb[0].mxu0
      %1153 = vdwg.mxu0
      %v1154 = vadd.f32 %v279, %v1102
      %v1155 = vadd.f32 %v280, %v1109
      %v1156 = vadd.f32 %v281, %v1116
      %v1157 = vadd.f32 %v282, %v1123
      %v1158 = vadd.f32 %v283, %v1130
      %v1159 = vadd.f32 %v284, %v1137
      %v1160 = vadd.f32 %v285, %v1144
      %v1161 = vadd.f32 %v286, %v1151
      %vm1162 = vcmask 31744
      %1163 = vst.msk [vmem:[#allocation2] sm:$0xff] %vm1162, %v1154
      %1164 = vst.msk [vmem:[#allocation2 + $0x8] sm:$0xff] %vm1162, %v1155
      %1165 = vst.msk [vmem:[#allocation2 + $0x10] sm:$0xff] %vm1162, %v1156
      %1166 = vst.msk [vmem:[#allocation2 + $0x18] sm:$0xff] %vm1162, %v1157
      %1167 = vst.msk [vmem:[#allocation2 + $0x20] sm:$0xff] %vm1162, %v1158
      %1168 = vst.msk [vmem:[#allocation2 + $0x28] sm:$0xff] %vm1162, %v1159
      %1169 = vst.msk [vmem:[#allocation2 + $0x30] sm:$0xff] %vm1162, %v1160
      %1170 = vst.msk [vmem:[#allocation2 + $0x38] sm:$0xff] %vm1162, %v1161
      // Predicated region
      $region33: #{_forward_impl.2} parent=27 // pred_check
        %p1171 = pneg %p172
      $region34: #{_forward_impl.2} parent=27 // pred_check_branch
        %1173 = sbr.rel (%p1171) target = $region36
      $region35: #{_forward_impl.2} parent=27 // pred_region
        %v1174 = vld [vmem:[#allocation2] sm:$0xff]
        %v1175 = vld [vmem:[#allocation2 + $0x8] sm:$0xff]
        %v1176 = vld [vmem:[#allocation2 + $0x10] sm:$0xff]
        %v1177 = vld [vmem:[#allocation2 + $0x18] sm:$0xff]
        %v1178 = vld [vmem:[#allocation2 + $0x20] sm:$0xff]
        %v1179 = vld [vmem:[#allocation2 + $0x28] sm:$0xff]
        %v1180 = vld [vmem:[#allocation2 + $0x30] sm:$0xff]
        %v1181 = vld [vmem:[#allocation2 + $0x38] sm:$0xff]
        %v1182 = vmul.f32 %v1174, %v1174
        %v1183 = vmul.f32 %v1175, %v1175
        %v1184 = vmul.f32 %v1176, %v1176
        %v1185 = vmul.f32 %v1177, %v1177
        %v1186 = vmul.f32 %v1178, %v1178
        %v1187 = vmul.f32 %v1179, %v1179
        %v1188 = vmul.f32 %v1180, %v1180
        %v1189 = vmul.f32 %v1181, %v1181
        %v1190 = vsel %vm1162, %v1182, 0.0
        %1191 = vadd.xlane.f32.xlu0 %v1190
        %v1192 = vpop.xlane.xlu0 %1191
        %v1193 = vsel %vm1162, %v1183, 0.0
        %1194 = vadd.xlane.f32.xlu0 %v1193
        %v1195 = vpop.xlane.xlu0 %1194
        %v1196 = vsel %vm1162, %v1184, 0.0
        %1197 = vadd.xlane.f32.xlu0 %v1196
        %v1198 = vpop.xlane.xlu0 %1197
        %v1199 = vsel %vm1162, %v1185, 0.0
        %1200 = vadd.xlane.f32.xlu0 %v1199
        %v1201 = vpop.xlane.xlu0 %1200
        %v1202 = vsel %vm1162, %v1186, 0.0
        %1203 = vadd.xlane.f32.xlu0 %v1202
        %v1204 = vpop.xlane.xlu0 %1203
        %v1205 = vsel %vm1162, %v1187, 0.0
        %1206 = vadd.xlane.f32.xlu0 %v1205
        %v1207 = vpop.xlane.xlu0 %1206
        %v1208 = vsel %vm1162, %v1188, 0.0
        %1209 = vadd.xlane.f32.xlu0 %v1208
        %v1210 = vpop.xlane.xlu0 %1209
        %v1211 = vsel %vm1162, %v1189, 0.0
        %1212 = vadd.xlane.f32.xlu0 %v1211
        %v1213 = vpop.xlane.xlu0 %1212
        %v1214 = vrsqrt.pop %v1192
        %v1215 = vmul.f32 %v1192, %v1214
        %vm1216 = vcmp.eq.f32.partialorder %v1192, inf
        %v1217 = vsel %vm1216, %v1192, %v1215
        %vm1218 = vcmp.eq.f32.partialorder %v1192, 0.0
        %v1219 = vand.u32 %v1192, 2147483648
        %v1220 = vsel %vm1218, %v1219, %v1217
        %v1221 = vrsqrt.pop %v1195
        %v1222 = vmul.f32 %v1195, %v1221
        %vm1223 = vcmp.eq.f32.partialorder %v1195, inf
        %v1224 = vsel %vm1223, %v1195, %v1222
        %vm1225 = vcmp.eq.f32.partialorder %v1195, 0.0
        %v1226 = vand.u32 %v1195, 2147483648
        %v1227 = vsel %vm1225, %v1226, %v1224
        %v1228 = vrsqrt.pop %v1198
        %v1229 = vmul.f32 %v1198, %v1228
        %vm1230 = vcmp.eq.f32.partialorder %v1198, inf
        %v1231 = vsel %vm1230, %v1198, %v1229
        %vm1232 = vcmp.eq.f32.partialorder %v1198, 0.0
        %v1233 = vand.u32 %v1198, 2147483648
        %v1234 = vsel %vm1232, %v1233, %v1231
        %v1235 = vrsqrt.pop %v1201
        %v1236 = vmul.f32 %v1201, %v1235
        %vm1237 = vcmp.eq.f32.partialorder %v1201, inf
        %v1238 = vsel %vm1237, %v1201, %v1236
        %vm1239 = vcmp.eq.f32.partialorder %v1201, 0.0
        %v1240 = vand.u32 %v1201, 2147483648
        %v1241 = vsel %vm1239, %v1240, %v1238
        %v1242 = vrsqrt.pop %v1204
        %v1243 = vmul.f32 %v1204, %v1242
        %vm1244 = vcmp.eq.f32.partialorder %v1204, inf
        %v1245 = vsel %vm1244, %v1204, %v1243
        %vm1246 = vcmp.eq.f32.partialorder %v1204, 0.0
        %v1247 = vand.u32 %v1204, 2147483648
        %v1248 = vsel %vm1246, %v1247, %v1245
        %v1249 = vrsqrt.pop %v1207
        %v1250 = vmul.f32 %v1207, %v1249
        %vm1251 = vcmp.eq.f32.partialorder %v1207, inf
        %v1252 = vsel %vm1251, %v1207, %v1250
        %vm1253 = vcmp.eq.f32.partialorder %v1207, 0.0
        %v1254 = vand.u32 %v1207, 2147483648
        %v1255 = vsel %vm1253, %v1254, %v1252
        %v1256 = vrsqrt.pop %v1210
        %v1257 = vmul.f32 %v1210, %v1256
        %vm1258 = vcmp.eq.f32.partialorder %v1210, inf
        %v1259 = vsel %vm1258, %v1210, %v1257
        %vm1260 = vcmp.eq.f32.partialorder %v1210, 0.0
        %v1261 = vand.u32 %v1210, 2147483648
        %v1262 = vsel %vm1260, %v1261, %v1259
        %v1263 = vrsqrt.pop %v1213
        %v1264 = vmul.f32 %v1213, %v1263
        %vm1265 = vcmp.eq.f32.partialorder %v1213, inf
        %v1266 = vsel %vm1265, %v1213, %v1264
        %vm1267 = vcmp.eq.f32.partialorder %v1213, 0.0
        %v1268 = vand.u32 %v1213, 2147483648
        %v1269 = vsel %vm1267, %v1268, %v1266
        %v1270 = vadd.f32 %v1220, 1e-07
        %v1271 = vadd.f32 %v1227, 1e-07
        %v1272 = vadd.f32 %v1234, 1e-07
        %v1273 = vadd.f32 %v1241, 1e-07
        %v1274 = vadd.f32 %v1248, 1e-07
        %v1275 = vadd.f32 %v1255, 1e-07
        %v1276 = vadd.f32 %v1262, 1e-07
        %v1277 = vadd.f32 %v1269, 1e-07
        %v1278 = vrcp.pop %v1270
        %v1279 = vrcp.pop %v1271
        %v1280 = vrcp.pop %v1272
        %v1281 = vrcp.pop %v1273
        %v1282 = vrcp.pop %v1274
        %v1283 = vrcp.pop %v1275
        %v1284 = vrcp.pop %v1276
        %v1285 = vrcp.pop %v1277
        %v1286 = vmul.f32 %v1174, %v1278
        %v1287 = vmul.f32 %v1175, %v1279
        %v1288 = vmul.f32 %v1176, %v1280
        %v1289 = vmul.f32 %v1177, %v1281
        %v1290 = vmul.f32 %v1178, %v1282
        %v1291 = vmul.f32 %v1179, %v1283
        %v1292 = vmul.f32 %v1180, %v1284
        %v1293 = vmul.f32 %v1181, %v1285
        %1294 = vst.msk [vmem:[%s171] sm:$0xff] %vm1162, %v1286
        %1295 = vst.msk [vmem:[%s171 + $0x8] sm:$0xff] %vm1162, %v1287
        %1296 = vst.msk [vmem:[%s171 + $0x10] sm:$0xff] %vm1162, %v1288
        %1297 = vst.msk [vmem:[%s171 + $0x18] sm:$0xff] %vm1162, %v1289
        %1298 = vst.msk [vmem:[%s171 + $0x20] sm:$0xff] %vm1162, %v1290
        %1299 = vst.msk [vmem:[%s171 + $0x28] sm:$0xff] %vm1162, %v1291
        %1300 = vst.msk [vmem:[%s171 + $0x30] sm:$0xff] %vm1162, %v1292
        %1301 = vst.msk [vmem:[%s171 + $0x38] sm:$0xff] %vm1162, %v1293
      $region36: #{_forward_impl.2} parent=27 // pred_fallthru
        _
      %p1302 = scmp.lt.s32.totalorder %s17, 1
      %s1303 = scalar_select %p1302, %s17, 1
      %s1304 = smul.addr %s1303, 8
      %s1305 = smul.addr %s1304, 8
      %s1306 = scalar_lea.vmem %s2, %s1305
      // Predicated region
      $region37: #{_forward_impl.2} parent=27 // pred_check
        %p1307 = pneg %p92
      $region38: #{_forward_impl.2} parent=27 // pred_check_branch
        %1309 = sbr.rel (%p1307) target = $region40
      $region39: #{_forward_impl.2} parent=27 // pred_region
        _
      $region40: #{_forward_impl.2} parent=27 // pred_fallthru
        _
    $region28: #{_forward_impl.2} parent=5 // pred_fallthru
      _
    %p1310 = scmp.le.s32.totalorder 2, %s8
    // Predicated region
    $region41: #{_forward_impl.2} parent=5 // pred_check
      %p1311 = pneg %p1310
    $region42: #{_forward_impl.2} parent=5 // pred_check_branch
      %1313 = sbr.rel (%p1311) target = $region44
    $region43: #{_forward_impl.2} parent=5 // pred_region
      %s1314 = ssub.s32 %s8, 2
      // Predicated region
      $region45: #{_forward_impl.2} parent=43 // pred_check
        %p1315 = pneg %p98
      $region46: #{_forward_impl.2} parent=43 // pred_check_branch
        %1317 = sbr.rel (%p1315) target = $region48
      $region47: #{_forward_impl.2} parent=43 // pred_region
        %p1318 = scmp.lt.s32.totalorder %s19, 1
        %s1319 = scalar_select %p1318, %s19, 1
        %s1320 = smul.addr %s1319, 8
        %s1321 = smul.addr %s1320, 8
        %s1322 = scalar_lea.vmem %s2, %s1321
      $region48: #{_forward_impl.2} parent=43 // pred_fallthru
        _
    $region44: #{_forward_impl.2} parent=5 // pred_fallthru
      _
  $region6: #{_forward_impl.2} parent=0 // loop_footer
    %s12 = sadd.s32 1, %s8
  $region7: #{_forward_impl.2} parent=0 // loop_footer_branch
    %7 = sbr.rel target = $region3
  $region8: #{_forward_impl.2} parent=0 // loop_exit
    _

// kernel: _forward_impl.3
$region0: #{_forward_impl.3}
  #allocation0 [shape = 'u32[]', space=smem, size = 0x4, offset = 0x4, fixed_abs, tag = 'smem constant byte address 0x4 - core index']
  #allocation1 [shape = 'u32[144,128]{1,0:T(1,128)}', space=vmem, size = 0x12000, scoped, tag = 'internal scratch']
  #allocation2 [shape = 'f32[64,8]{1,0:T(8,128)}', space=vmem, size = 0x8000, scoped, tag = 'scratch operand']
  %s0 = inlined_call_operand.vmem [shape: s32[64,1], index: 0, kind: input, shape index: {}]
  %s1 = inlined_call_operand.vmem [shape: f32[2,8,64], index: 1, kind: input, shape index: {}]
  %s2 = inlined_call_operand.vmem [shape: f32[2,64,8], index: 2, kind: output, shape index: {}]
  %s3 = sld [smem:[#allocation0]]
  $region49: #{_forward_impl.3} parent=0
    _
  %s5 = ssub.s32 1, %s3
  %s6 = scalar_select 0, %s5, %s3
  loop: start=0, step=1, limit=4
  $region2: #{_forward_impl.3} parent=0 // loop_pre_header
    _
  $region3: #{_forward_impl.3} parent=0 // loop_header
    %s8 = sphi 0, %s12
    %p9 = scmp.ge.s32.totalorder %s8, 4
    %s15 = sphi 0, %s27
    %s16 = sphi 0, %s23
    %s17 = sphi 0, %s15
    %s18 = sphi 0, %s16
    %s19 = sphi 0, %s17
    %s20 = sphi 0, %s18
    %s28 = sphi 0, %s28
    %s30 = sphi 0, %s28
    %s31 = sphi 0, %s30
    %s45 = sphi 0, %s31
    %s53 = sphi 0, %s55
    %s56 = sphi 0, %s53
    %s57 = sphi 0, %s56
    %s73 = sphi 0, %s57
    %s79 = sphi 0, %s81
    %s82 = sphi 0, %s79
    %s83 = sphi 0, %s82
    %s99 = sphi 0, %s83
  $region4: #{_forward_impl.3} parent=0 // loop_header_branch
    %11 = sbr.rel (%p9) target = $region8
  $region5: #{_forward_impl.3} parent=0 // loop_body
    %s13 = ssub.s32 %s8, 1
    %s14 = ssub.s32 %s8, 2
    %s21 = sadd.s32 1, %s16
    %p22 = scmp.ge.s32.totalorder %s21, 1
    %s23 = scalar_select %p22, 0, %s21
    %s24 = sadd.s32 1, %s15
    %s25 = scalar_select %p22, %s24, %s15
    %p26 = scmp.ge.s32.totalorder %s25, 2
    %s27 = scalar_select %p26, 0, %s25
    %s29 = sadd.s32 %s28, 1
    %p32 = scmp.eq.s32.totalorder %s8, 1
    %p33 = scmp.ne.s32.totalorder %s28, %s30
    %p34 = scmp.eq.s32.totalorder %s8, 0
    %p35 = por %p33, %p34
    %p36 = scmp.ne.s32.totalorder %s28, %s30
    %p37 = scmp.eq.s32.totalorder %s13, 1
    %p38 = por %p36, %p37
    %p39 = scmp.ne.s32.totalorder %s30, %s31
    %p40 = scmp.eq.s32.totalorder %s13, 0
    %p41 = por %p39, %p40
    %p42 = scmp.ne.s32.totalorder %s30, %s31
    %p43 = scmp.eq.s32.totalorder %s14, 1
    %p44 = por %p42, %p43
    %p46 = scmp.ne.s32.totalorder %s31, %s45
    %p47 = scmp.eq.s32.totalorder %s14, 0
    %p48 = por %p46, %p47
    %s49 = ssub.s32 %s15, %s27
    %s50 = ssub.s32 %s16, %s23
    %s51 = sor.u32 %s49, %s50
    %p52 = scmp.eq.s32.totalorder %s51, 0
    %s54 = sadd.s32 %s53, 1
    %s55 = scalar_select %p52, %s53, %s54
    %p58 = pneg %p52
    %p59 = scmp.eq.s32.totalorder %s8, 1
    %p60 = por %p58, %p59
    %p61 = scmp.ne.s32.totalorder %s53, %s56
    %p62 = scmp.eq.s32.totalorder %s8, 0
    %p63 = por %p61, %p62
    %p64 = scmp.ne.s32.totalorder %s53, %s56
    %p65 = scmp.eq.s32.totalorder %s13, 1
    %p66 = por %p64, %p65
    %p67 = scmp.ne.s32.totalorder %s56, %s57
    %p68 = scmp.eq.s32.totalorder %s13, 0
    %p69 = por %p67, %p68
    %p70 = scmp.ne.s32.totalorder %s56, %s57
    %p71 = scmp.eq.s32.totalorder %s14, 1
    %p72 = por %p70, %p71
    %p74 = scmp.ne.s32.totalorder %s57, %s73
    %p75 = scmp.eq.s32.totalorder %s14, 0
    %p76 = por %p74, %p75
    %s77 = ssub.s32 %s15, %s27
    %p78 = scmp.eq.s32.totalorder %s77, 0
    %s80 = sadd.s32 %s79, 1
    %s81 = scalar_select %p78, %s79, %s80
    %p84 = pneg %p78
    %p85 = scmp.eq.s32.totalorder %s8, 1
    %p86 = por %p84, %p85
    %p87 = scmp.ne.s32.totalorder %s79, %s82
    %p88 = scmp.eq.s32.totalorder %s8, 0
    %p89 = por %p87, %p88
    %p90 = scmp.ne.s32.totalorder %s79, %s82
    %p91 = scmp.eq.s32.totalorder %s13, 1
    %p92 = por %p90, %p91
    %p93 = scmp.ne.s32.totalorder %s82, %s83
    %p94 = scmp.eq.s32.totalorder %s13, 0
    %p95 = por %p93, %p94
    %p96 = scmp.ne.s32.totalorder %s82, %s83
    %p97 = scmp.eq.s32.totalorder %s14, 1
    %p98 = por %p96, %p97
    %p100 = scmp.ne.s32.totalorder %s83, %s99
    %p101 = scmp.eq.s32.totalorder %s14, 0
    %p102 = por %p100, %p101
    %p103 = scmp.le.s32.totalorder 1, %s8
    %p104 = scmp.lt.s32.totalorder %s8, 3
    %p105 = pnand %p103, %p104
    %p106 = pneg %p105
    // Predicated region
    $region9: #{_forward_impl.3} parent=5 // pred_check
      _
    $region10: #{_forward_impl.3} parent=5 // pred_check_branch
      %108 = sbr.rel (%p105) target = $region12
    $region11: #{_forward_impl.3} parent=5 // pred_region
      %s109 = ssub.s32 %s8, 1
      // Predicated region
      $region13: #{_forward_impl.3} parent=11 // pred_check
        %p110 = pneg %p41
      $region14: #{_forward_impl.3} parent=11 // pred_check_branch
        %112 = sbr.rel (%p110) target = $region16
      $region15: #{_forward_impl.3} parent=11 // pred_region
        _
      $region16: #{_forward_impl.3} parent=11 // pred_fallthru
        _
    $region12: #{_forward_impl.3} parent=5 // pred_fallthru
      _
    %p113 = scmp.lt.s32.totalorder %s8, 2
    // Predicated region
    $region17: #{_forward_impl.3} parent=5 // pred_check
      %p114 = pneg %p113
    $region18: #{_forward_impl.3} parent=5 // pred_check_branch
      %116 = sbr.rel (%p114) target = $region20
    $region19: #{_forward_impl.3} parent=5 // pred_region
      // Predicated region
      $region21: #{_forward_impl.3} parent=19 // pred_check
        %p117 = pneg %p63
      $region22: #{_forward_impl.3} parent=19 // pred_check_branch
        %119 = sbr.rel (%p117) target = $region24
      $region23: #{_forward_impl.3} parent=19 // pred_region
        %p120 = scmp.lt.s32.totalorder %s15, 1
        %s121 = scalar_select %p120, %s15, 1
        %p122 = scmp.lt.s32.totalorder %s16, 0
        %s123 = scalar_select %p122, %s16, 0
        %s124 = sadd.s32 %s123, %s121
        %s125 = smul.addr %s124, 8
        %s126 = scalar_lea.vmem %s1, %s125
      $region24: #{_forward_impl.3} parent=19 // pred_fallthru
        _
    $region20: #{_forward_impl.3} parent=5 // pred_fallthru
      _
    %p127 = scmp.le.s32.totalorder 1, %s8
    %p128 = scmp.lt.s32.totalorder %s8, 3
    %p129 = pnand %p127, %p128
    %p130 = pneg %p129
    // Predicated region
    $region25: #{_forward_impl.3} parent=5 // pred_check
      _
    $region26: #{_forward_impl.3} parent=5 // pred_check_branch
      %132 = sbr.rel (%p129) target = $region28
    $region27: #{_forward_impl.3} parent=5 // pred_region
      %s133 = ssub.s32 %s8, 1
      %p134 = pneg %p41
      %p135 = pneg %p38
      %p136 = scmp.lt.s32.totalorder %s17, 1
      %s137 = scalar_select %p136, %s17, 1
      %p138 = scmp.lt.s32.totalorder %s18, 0
      %s139 = scalar_select %p138, %s18, 0
      %s140 = sadd.s32 %s139, %s137
      %s141 = smul.addr %s140, 8
      %s142 = scalar_lea.vmem %s1, %s141
      %p143 = pneg %p69
      %p144 = pneg %p66
      %p145 = pneg %p95
      %p146 = pneg %p92
      %p147 = scmp.lt.s32.totalorder %s17, 1
      %s148 = scalar_select %p147, %s17, 1
      %s149 = smul.addr %s148, 8
      %s150 = smul.addr %s149, 8
      %s151 = scalar_lea.vmem %s2, %s150
      %p152 = scmp.lt.s32.totalorder %s17, 1
      %s153 = scalar_select %p152, %s17, 1
      %p154 = scmp.lt.s32.totalorder %s18, 0
      %s155 = scalar_select %p154, %s18, 0
      %s156 = sadd.s32 %s155, %s153
      %s157 = smul.addr %s156, 8
      %s158 = scalar_lea.vmem %s1, %s157
      %p159 = scmp.lt.s32.totalorder %s17, 1
      %s160 = scalar_select %p159, %s17, 1
      %s161 = smul.addr %s160, 8
      %s162 = smul.addr %s161, 8
      %s163 = scalar_lea.vmem %s2, %s162
      %p164 = scmp.eq.s32.totalorder %s18, 0
      // Predicated region
      $region29: #{_forward_impl.3} parent=27 // pred_check
        %p165 = pneg %p164
      $region30: #{_forward_impl.3} parent=27 // pred_check_branch
        %167 = sbr.rel (%p165) target = $region32
      $region31: #{_forward_impl.3} parent=27 // pred_region
        %vm168 = vcmask 64512
        %169 = vst.msk [vmem:[#allocation2] sm:$0xff] %vm168, 0.0
        %170 = vst.msk [vmem:[#allocation2 + $0x8] sm:$0xff] %vm168, 0.0
        %171 = vst.msk [vmem:[#allocation2 + $0x10] sm:$0xff] %vm168, 0.0
        %172 = vst.msk [vmem:[#allocation2 + $0x18] sm:$0xff] %vm168, 0.0
        %173 = vst.msk [vmem:[#allocation2 + $0x20] sm:$0xff] %vm168, 0.0
        %174 = vst.msk [vmem:[#allocation2 + $0x28] sm:$0xff] %vm168, 0.0
        %175 = vst.msk [vmem:[#allocation2 + $0x30] sm:$0xff] %vm168, 0.0
        %176 = vst.msk [vmem:[#allocation2 + $0x38] sm:$0xff] %vm168, 0.0
      $region32: #{_forward_impl.3} parent=27 // pred_fallthru
        _
      %v177 = vld [vmem:[%s158] sm:$0xff]
      %v178 = vld [vmem:[%s0] sm:$0xff]
      %v179 = vld [vmem:[%s0 + $0x8] sm:$0xff]
      %v180 = vld [vmem:[%s0 + $0x10] sm:$0xff]
      %v181 = vld [vmem:[%s0 + $0x18] sm:$0xff]
      %v182 = vld [vmem:[%s0 + $0x20] sm:$0xff]
      %v183 = vld [vmem:[%s0 + $0x28] sm:$0xff]
      %v184 = vld [vmem:[%s0 + $0x30] sm:$0xff]
      %v185 = vld [vmem:[%s0 + $0x38] sm:$0xff]
      %s186 = smul.u32 %s18, 64
      %v187 = vstv %s186
      %v188 = vsub.s32 %v178, %v187
      %v189 = vsub.s32 %v179, %v187
      %v190 = vsub.s32 %v180, %v187
      %v191 = vsub.s32 %v181, %v187
      %v192 = vsub.s32 %v182, %v187
      %v193 = vsub.s32 %v183, %v187
      %v194 = vsub.s32 %v184, %v187
      %v195 = vsub.s32 %v185, %v187
      %v196 = vlaneseq
      %v197 = vand.u32 %v196, 127
      %198 = vset.pattern.permute.xlu0 0
      %199 = vperm.xlu0 %198, %v188
      %v200 = vpop.permute.xlu0 %199
      %201 = vset.pattern.permute.xlu0 0
      %202 = vperm.xlu0 %201, %v189
      %v203 = vpop.permute.xlu0 %202
      %204 = vset.pattern.permute.xlu0 0
      %205 = vperm.xlu0 %204, %v190
      %v206 = vpop.permute.xlu0 %205
      %207 = vset.pattern.permute.xlu0 0
      %208 = vperm.xlu0 %207, %v191
      %v209 = vpop.permute.xlu0 %208
      %210 = vset.pattern.permute.xlu0 0
      %211 = vperm.xlu0 %210, %v192
      %v212 = vpop.permute.xlu0 %211
      %213 = vset.pattern.permute.xlu0 0
      %214 = vperm.xlu0 %213, %v193
      %v215 = vpop.permute.xlu0 %214
      %216 = vset.pattern.permute.xlu0 0
      %217 = vperm.xlu0 %216, %v194
      %v218 = vpop.permute.xlu0 %217
      %219 = vset.pattern.permute.xlu0 0
      %220 = vperm.xlu0 %219, %v195
      %v221 = vpop.permute.xlu0 %220
      %vm222 = vcmp.eq.s32.totalorder %v197, %v200
      %vm223 = vcmp.eq.s32.totalorder %v197, %v203
      %vm224 = vcmp.eq.s32.totalorder %v197, %v206
      %vm225 = vcmp.eq.s32.totalorder %v197, %v209
      %vm226 = vcmp.eq.s32.totalorder %v197, %v212
      %vm227 = vcmp.eq.s32.totalorder %v197, %v215
      %vm228 = vcmp.eq.s32.totalorder %v197, %v218
      %vm229 = vcmp.eq.s32.totalorder %v197, %v221
      %v230 = vsel %vm222, 1, 0
      %v231 = vsel %vm223, 1, 0
      %v232 = vsel %vm224, 1, 0
      %v233 = vsel %vm225, 1, 0
      %v234 = vsel %vm226, 1, 0
      %v235 = vsel %vm227, 1, 0
      %v236 = vsel %vm228, 1, 0
      %v237 = vsel %vm229, 1, 0
      %v238 = vcvt.s32.f32 %v230
      %v239 = vcvt.s32.f32 %v231
      %v240 = vcvt.s32.f32 %v232
      %v241 = vcvt.s32.f32 %v233
      %v242 = vcvt.s32.f32 %v234
      %v243 = vcvt.s32.f32 %v235
      %v244 = vcvt.s32.f32 %v236
      %v245 = vcvt.s32.f32 %v237
      %v246 = vld [vmem:[#allocation2] sm:$0xff]
      %v247 = vld [vmem:[#allocation2 + $0x8] sm:$0xff]
      %v248 = vld [vmem:[#allocation2 + $0x10] sm:$0xff]
      %v249 = vld [vmem:[#allocation2 + $0x18] sm:$0xff]
      %v250 = vld [vmem:[#allocation2 + $0x20] sm:$0xff]
      %v251 = vld [vmem:[#allocation2 + $0x28] sm:$0xff]
      %v252 = vld [vmem:[#allocation2 + $0x30] sm:$0xff]
      %v253 = vld [vmem:[#allocation2 + $0x38] sm:$0xff]
      %vm254 = vcmask 523264
      %v256 = vsel %vm254, %v238, 0
      %v259 = vsel %vm254, %v239, 0
      %v262 = vsel %vm254, %v240, 0
      %v265 = vsel %vm254, %v241, 0
      %v268 = vsel %vm254, %v242, 0
      %v271 = vsel %vm254, %v243, 0
      %v274 = vsel %vm254, %v244, 0
      %v277 = vsel %vm254, %v245, 0
      %v280 = vsel %vm254, %v177, 0
      %282 = vmatprep.subr.mxu0 0.0
      %v283 = vand.u32 %v280, 4294901760
      %284 = vmatpush1.xpose.msra.mxu0 %v283
      %285 = vmatprep.subr.mxu0 0.0
      %286 = vmatpush1.xpose.msra.mxu0 0.0
      %287 = vmatprep.subr.mxu0 0.0
      %288 = vmatpush1.xpose.msra.mxu0 0.0
      %289 = vmatprep.subr.mxu0 0.0
      %290 = vmatpush1.xpose.msra.mxu0 0.0
      %291 = vmatprep.subr.mxu0 0.0
      %292 = vmatpush1.xpose.msra.mxu0 0.0
      %293 = vmatprep.subr.mxu0 0.0
      %294 = vmatpush1.xpose.msra.mxu0 0.0
      %295 = vmatprep.subr.mxu0 0.0
      %296 = vmatpush1.xpose.msra.mxu0 0.0
      %297 = vmatprep.subr.mxu0 0.0
      %298 = vmatpush1.xpose.msra.mxu0 0.0
      %299 = vmatprep.subr.mxu0 0.0
      %300 = vmatpush1.xpose.msra.mxu0 0.0
      %301 = vmatprep.subr.mxu0 0.0
      %302 = vmatpush1.xpose.msra.mxu0 0.0
      %303 = vmatprep.subr.mxu0 0.0
      %304 = vmatpush1.xpose.msra.mxu0 0.0
      %305 = vmatprep.subr.mxu0 0.0
      %306 = vmatpush1.xpose.msra.mxu0 0.0
      %307 = vmatprep.subr.mxu0 0.0
      %308 = vmatpush1.xpose.msra.mxu0 0.0
      %309 = vmatprep.subr.mxu0 0.0
      %310 = vmatpush1.xpose.msra.mxu0 0.0
      %311 = vmatprep.subr.mxu0 0.0
      %312 = vmatpush1.xpose.msra.mxu0 0.0
      %313 = vmatprep.subr.mxu0 0.0
      %314 = vmatpush1.xpose.msra.mxu0 0.0
      %315 = vmatprep.subr.mxu0 0.0
      %316 = vmatpush1.xpose.msra.mxu0 0.0
      %317 = vmatprep.subr.mxu0 0.0
      %318 = vmatpush1.xpose.msra.mxu0 0.0
      %319 = vmatprep.subr.mxu0 0.0
      %320 = vmatpush1.xpose.msra.mxu0 0.0
      %321 = vmatprep.subr.mxu0 0.0
      %322 = vmatpush1.xpose.msra.mxu0 0.0
      %323 = vmatprep.subr.mxu0 0.0
      %324 = vmatpush1.xpose.msra.mxu0 0.0
      %325 = vmatprep.subr.mxu0 0.0
      %326 = vmatpush1.xpose.msra.mxu0 0.0
      %327 = vmatprep.subr.mxu0 0.0
      %328 = vmatpush1.xpose.msra.mxu0 0.0
      %329 = vmatprep.subr.mxu0 0.0
      %330 = vmatpush1.xpose.msra.mxu0 0.0
      %331 = vmatprep.subr.mxu0 0.0
      %332 = vmatpush1.xpose.msra.mxu0 0.0
      %333 = vmatprep.subr.mxu0 0.0
      %334 = vmatpush1.xpose.msra.mxu0 0.0
      %335 = vmatprep.subr.mxu0 0.0
      %336 = vmatpush1.xpose.msra.mxu0 0.0
      %337 = vmatprep.subr.mxu0 0.0
      %338 = vmatpush1.xpose.msra.mxu0 0.0
      %339 = vmatprep.subr.mxu0 0.0
      %340 = vmatpush1.xpose.msra.mxu0 0.0
      %341 = vmatprep.subr.mxu0 0.0
      %342 = vmatpush1.xpose.msra.mxu0 0.0
      %343 = vmatprep.subr.mxu0 0.0
      %344 = vmatpush1.xpose.msra.mxu0 0.0
      %345 = vmatprep.subr.mxu0 0.0
      %346 = vmatpush1.xpose.msra.mxu0 0.0
      %347 = vmatprep.mubr.f32.mxu0 0.0
      %v348 = vand.u32 %v256, 4294901760
      %v349 = vsub.f32 %v256, %v348
      %v350 = vand.u32 %v349, 4294901760
      %v351 = vsub.f32 %v349, %v350
      %v352 = vand.u32 %v351, 4294901760
      %353 = vmatmul.mubr.f32.gmra.mrb[0].mxu0 %v352
      %v354 = vpop.f32.mrb[0].mxu0
      %v355 = vadd.f32 0.0, %v354
      %v356 = vpop.f32.mrb[0].mxu0
      %357 = vmatprep.mubr.f32.mxu0 0.0
      %v358 = vand.u32 %v259, 4294901760
      %v359 = vsub.f32 %v259, %v358
      %v360 = vand.u32 %v359, 4294901760
      %v361 = vsub.f32 %v359, %v360
      %v362 = vand.u32 %v361, 4294901760
      %363 = vmatmul.mubr.f32.gmra.mrb[0].mxu0 %v362
      %v364 = vpop.f32.mrb[0].mxu0
      %v365 = vadd.f32 0.0, %v364
      %v366 = vpop.f32.mrb[0].mxu0
      %367 = vmatprep.mubr.f32.mxu0 0.0
      %v368 = vand.u32 %v262, 4294901760
      %v369 = vsub.f32 %v262, %v368
      %v370 = vand.u32 %v369, 4294901760
      %v371 = vsub.f32 %v369, %v370
      %v372 = vand.u32 %v371, 4294901760
      %373 = vmatmul.mubr.f32.gmra.mrb[0].mxu0 %v372
      %v374 = vpop.f32.mrb[0].mxu0
      %v375 = vadd.f32 0.0, %v374
      %v376 = vpop.f32.mrb[0].mxu0
      %377 = vmatprep.mubr.f32.mxu0 0.0
      %v378 = vand.u32 %v265, 4294901760
      %v379 = vsub.f32 %v265, %v378
      %v380 = vand.u32 %v379, 4294901760
      %v381 = vsub.f32 %v379, %v380
      %v382 = vand.u32 %v381, 4294901760
      %383 = vmatmul.mubr.f32.gmra.mrb[0].mxu0 %v382
      %v384 = vpop.f32.mrb[0].mxu0
      %v385 = vadd.f32 0.0, %v384
      %v386 = vpop.f32.mrb[0].mxu0
      %387 = vmatprep.mubr.f32.mxu0 0.0
      %v388 = vand.u32 %v268, 4294901760
      %v389 = vsub.f32 %v268, %v388
      %v390 = vand.u32 %v389, 4294901760
      %v391 = vsub.f32 %v389, %v390
      %v392 = vand.u32 %v391, 4294901760
      %393 = vmatmul.mubr.f32.gmra.mrb[0].mxu0 %v392
      %v394 = vpop.f32.mrb[0].mxu0
      %v395 = vadd.f32 0.0, %v394
      %v396 = vpop.f32.mrb[0].mxu0
      %397 = vmatprep.mubr.f32.mxu0 0.0
      %v398 = vand.u32 %v271, 4294901760
      %v399 = vsub.f32 %v271, %v398
      %v400 = vand.u32 %v399, 4294901760
      %v401 = vsub.f32 %v399, %v400
      %v402 = vand.u32 %v401, 4294901760
      %403 = vmatmul.mubr.f32.gmra.mrb[0].mxu0 %v402
      %v404 = vpop.f32.mrb[0].mxu0
      %v405 = vadd.f32 0.0, %v404
      %v406 = vpop.f32.mrb[0].mxu0
      %407 = vmatprep.mubr.f32.mxu0 0.0
      %v408 = vand.u32 %v274, 4294901760
      %v409 = vsub.f32 %v274, %v408
      %v410 = vand.u32 %v409, 4294901760
      %v411 = vsub.f32 %v409, %v410
      %v412 = vand.u32 %v411, 4294901760
      %413 = vmatmul.mubr.f32.gmra.mrb[0].mxu0 %v412
      %v414 = vpop.f32.mrb[0].mxu0
      %v415 = vadd.f32 0.0, %v414
      %v416 = vpop.f32.mrb[0].mxu0
      %417 = vmatprep.mubr.f32.mxu0 0.0
      %v418 = vand.u32 %v277, 4294901760
      %v419 = vsub.f32 %v277, %v418
      %v420 = vand.u32 %v419, 4294901760
      %v421 = vsub.f32 %v419, %v420
      %v422 = vand.u32 %v421, 4294901760
      %423 = vmatmul.mubr.f32.gmra.mrb[0].mxu0 %v422
      %v424 = vpop.f32.mrb[0].mxu0
      %v425 = vadd.f32 0.0, %v424
      %v426 = vpop.f32.mrb[0].mxu0
      %427 = vdwg.mxu0
      %428 = vmatprep.subr.mxu0 0.0
      %v429 = vand.u32 %v280, 4294901760
      %v430 = vsub.f32 %v280, %v429
      %v431 = vand.u32 %v430, 4294901760
      %v432 = vsub.f32 %v430, %v431
      %v433 = vand.u32 %v432, 4294901760
      %434 = vmatpush1.xpose.msra.mxu0 %v433
      %435 = vmatprep.subr.mxu0 0.0
      %436 = vmatpush1.xpose.msra.mxu0 0.0
      %437 = vmatprep.subr.mxu0 0.0
      %438 = vmatpush1.xpose.msra.mxu0 0.0
      %439 = vmatprep.subr.mxu0 0.0
      %440 = vmatpush1.xpose.msra.mxu0 0.0
      %441 = vmatprep.subr.mxu0 0.0
      %442 = vmatpush1.xpose.msra.mxu0 0.0
      %443 = vmatprep.subr.mxu0 0.0
      %444 = vmatpush1.xpose.msra.mxu0 0.0
      %445 = vmatprep.subr.mxu0 0.0
      %446 = vmatpush1.xpose.msra.mxu0 0.0
      %447 = vmatprep.subr.mxu0 0.0
      %448 = vmatpush1.xpose.msra.mxu0 0.0
      %449 = vmatprep.subr.mxu0 0.0
      %450 = vmatpush1.xpose.msra.mxu0 0.0
      %451 = vmatprep.subr.mxu0 0.0
      %452 = vmatpush1.xpose.msra.mxu0 0.0
      %453 = vmatprep.subr.mxu0 0.0
      %454 = vmatpush1.xpose.msra.mxu0 0.0
      %455 = vmatprep.subr.mxu0 0.0
      %456 = vmatpush1.xpose.msra.mxu0 0.0
      %457 = vmatprep.subr.mxu0 0.0
      %458 = vmatpush1.xpose.msra.mxu0 0.0
      %459 = vmatprep.subr.mxu0 0.0
      %460 = vmatpush1.xpose.msra.mxu0 0.0
      %461 = vmatprep.subr.mxu0 0.0
      %462 = vmatpush1.xpose.msra.mxu0 0.0
      %463 = vmatprep.subr.mxu0 0.0
      %464 = vmatpush1.xpose.msra.mxu0 0.0
      %465 = vmatprep.subr.mxu0 0.0
      %466 = vmatpush1.xpose.msra.mxu0 0.0
      %467 = vmatprep.subr.mxu0 0.0
      %468 = vmatpush1.xpose.msra.mxu0 0.0
      %469 = vmatprep.subr.mxu0 0.0
      %470 = vmatpush1.xpose.msra.mxu0 0.0
      %471 = vmatprep.subr.mxu0 0.0
      %472 = vmatpush1.xpose.msra.mxu0 0.0
      %473 = vmatprep.subr.mxu0 0.0
      %474 = vmatpush1.xpose.msra.mxu0 0.0
      %475 = vmatprep.subr.mxu0 0.0
      %476 = vmatpush1.xpose.msra.mxu0 0.0
      %477 = vmatprep.subr.mxu0 0.0
      %478 = vmatpush1.xpose.msra.mxu0 0.0
      %479 = vmatprep.subr.mxu0 0.0
      %480 = vmatpush1.xpose.msra.mxu0 0.0
      %481 = vmatprep.subr.mxu0 0.0
      %482 = vmatpush1.xpose.msra.mxu0 0.0
      %483 = vmatprep.subr.mxu0 0.0
      %484 = vmatpush1.xpose.msra.mxu0 0.0
      %485 = vmatprep.subr.mxu0 0.0
      %486 = vmatpush1.xpose.msra.mxu0 0.0
      %487 = vmatprep.subr.mxu0 0.0
      %488 = vmatpush1.xpose.msra.mxu0 0.0
      %489 = vmatprep.subr.mxu0 0.0
      %490 = vmatpush1.xpose.msra.mxu0 0.0
      %491 = vmatprep.subr.mxu0 0.0
      %492 = vmatpush1.xpose.msra.mxu0 0.0
      %493 = vmatprep.subr.mxu0 0.0
      %494 = vmatpush1.xpose.msra.mxu0 0.0
      %495 = vmatprep.subr.mxu0 0.0
      %496 = vmatpush1.xpose.msra.mxu0 0.0
      %497 = vmatprep.mubr.f32.mxu0 0.0
      %v498 = vand.u32 %v256, 4294901760
      %499 = vmatmul.mubr.f32.gmra.mrb[0].mxu0 %v498
      %v500 = vpop.f32.mrb[0].mxu0
      %v501 = vadd.f32 %v355, %v500
      %v502 = vpop.f32.mrb[0].mxu0
      %503 = vmatprep.mubr.f32.mxu0 0.0
      %v504 = vand.u32 %v259, 4294901760
      %505 = vmatmul.mubr.f32.gmra.mrb[0].mxu0 %v504
      %v506 = vpop.f32.mrb[0].mxu0
      %v507 = vadd.f32 %v365, %v506
      %v508 = vpop.f32.mrb[0].mxu0
      %509 = vmatprep.mubr.f32.mxu0 0.0
      %v510 = vand.u32 %v262, 4294901760
      %511 = vmatmul.mubr.f32.gmra.mrb[0].mxu0 %v510
      %v512 = vpop.f32.mrb[0].mxu0
      %v513 = vadd.f32 %v375, %v512
      %v514 = vpop.f32.mrb[0].mxu0
      %515 = vmatprep.mubr.f32.mxu0 0.0
      %v516 = vand.u32 %v265, 4294901760
      %517 = vmatmul.mubr.f32.gmra.mrb[0].mxu0 %v516
      %v518 = vpop.f32.mrb[0].mxu0
      %v519 = vadd.f32 %v385, %v518
      %v520 = vpop.f32.mrb[0].mxu0
      %521 = vmatprep.mubr.f32.mxu0 0.0
      %v522 = vand.u32 %v268, 4294901760
      %523 = vmatmul.mubr.f32.gmra.mrb[0].mxu0 %v522
      %v524 = vpop.f32.mrb[0].mxu0
      %v525 = vadd.f32 %v395, %v524
      %v526 = vpop.f32.mrb[0].mxu0
      %527 = vmatprep.mubr.f32.mxu0 0.0
      %v528 = vand.u32 %v271, 4294901760
      %529 = vmatmul.mubr.f32.gmra.mrb[0].mxu0 %v528
      %v530 = vpop.f32.mrb[0].mxu0
      %v531 = vadd.f32 %v405, %v530
      %v532 = vpop.f32.mrb[0].mxu0
      %533 = vmatprep.mubr.f32.mxu0 0.0
      %v534 = vand.u32 %v274, 4294901760
      %535 = vmatmul.mubr.f32.gmra.mrb[0].mxu0 %v534
      %v536 = vpop.f32.mrb[0].mxu0
      %v537 = vadd.f32 %v415, %v536
      %v538 = vpop.f32.mrb[0].mxu0
      %539 = vmatprep.mubr.f32.mxu0 0.0
      %v540 = vand.u32 %v277, 4294901760
      %541 = vmatmul.mubr.f32.gmra.mrb[0].mxu0 %v540
      %v542 = vpop.f32.mrb[0].mxu0
      %v543 = vadd.f32 %v425, %v542
      %v544 = vpop.f32.mrb[0].mxu0
      %545 = vdwg.mxu0
      %546 = vmatprep.subr.mxu0 0.0
      %v547 = vand.u32 %v280, 4294901760
      %v548 = vsub.f32 %v280, %v547
      %549 = vmatpush1.xpose.msra.mxu0 %v548
      %550 = vmatprep.subr.mxu0 0.0
      %551 = vmatpush1.xpose.msra.mxu0 0.0
      %552 = vmatprep.subr.mxu0 0.0
      %553 = vmatpush1.xpose.msra.mxu0 0.0
      %554 = vmatprep.subr.mxu0 0.0
      %555 = vmatpush1.xpose.msra.mxu0 0.0
      %556 = vmatprep.subr.mxu0 0.0
      %557 = vmatpush1.xpose.msra.mxu0 0.0
      %558 = vmatprep.subr.mxu0 0.0
      %559 = vmatpush1.xpose.msra.mxu0 0.0
      %560 = vmatprep.subr.mxu0 0.0
      %561 = vmatpush1.xpose.msra.mxu0 0.0
      %562 = vmatprep.subr.mxu0 0.0
      %563 = vmatpush1.xpose.msra.mxu0 0.0
      %564 = vmatprep.subr.mxu0 0.0
      %565 = vmatpush1.xpose.msra.mxu0 0.0
      %566 = vmatprep.subr.mxu0 0.0
      %567 = vmatpush1.xpose.msra.mxu0 0.0
      %568 = vmatprep.subr.mxu0 0.0
      %569 = vmatpush1.xpose.msra.mxu0 0.0
      %570 = vmatprep.subr.mxu0 0.0
      %571 = vmatpush1.xpose.msra.mxu0 0.0
      %572 = vmatprep.subr.mxu0 0.0
      %573 = vmatpush1.xpose.msra.mxu0 0.0
      %574 = vmatprep.subr.mxu0 0.0
      %575 = vmatpush1.xpose.msra.mxu0 0.0
      %576 = vmatprep.subr.mxu0 0.0
      %577 = vmatpush1.xpose.msra.mxu0 0.0
      %578 = vmatprep.subr.mxu0 0.0
      %579 = vmatpush1.xpose.msra.mxu0 0.0
      %580 = vmatprep.subr.mxu0 0.0
      %581 = vmatpush1.xpose.msra.mxu0 0.0
      %582 = vmatprep.subr.mxu0 0.0
      %583 = vmatpush1.xpose.msra.mxu0 0.0
      %584 = vmatprep.subr.mxu0 0.0
      %585 = vmatpush1.xpose.msra.mxu0 0.0
      %586 = vmatprep.subr.mxu0 0.0
      %587 = vmatpush1.xpose.msra.mxu0 0.0
      %588 = vmatprep.subr.mxu0 0.0
      %589 = vmatpush1.xpose.msra.mxu0 0.0
      %590 = vmatprep.subr.mxu0 0.0
      %591 = vmatpush1.xpose.msra.mxu0 0.0
      %592 = vmatprep.subr.mxu0 0.0
      %593 = vmatpush1.xpose.msra.mxu0 0.0
      %594 = vmatprep.subr.mxu0 0.0
      %595 = vmatpush1.xpose.msra.mxu0 0.0
      %596 = vmatprep.subr.mxu0 0.0
      %597 = vmatpush1.xpose.msra.mxu0 0.0
      %598 = vmatprep.subr.mxu0 0.0
      %599 = vmatpush1.xpose.msra.mxu0 0.0
      %600 = vmatprep.subr.mxu0 0.0
      %601 = vmatpush1.xpose.msra.mxu0 0.0
      %602 = vmatprep.subr.mxu0 0.0
      %603 = vmatpush1.xpose.msra.mxu0 0.0
      %604 = vmatprep.subr.mxu0 0.0
      %605 = vmatpush1.xpose.msra.mxu0 0.0
      %606 = vmatprep.subr.mxu0 0.0
      %607 = vmatpush1.xpose.msra.mxu0 0.0
      %608 = vmatprep.subr.mxu0 0.0
      %609 = vmatpush1.xpose.msra.mxu0 0.0
      %610 = vmatprep.subr.mxu0 0.0
      %611 = vmatpush1.xpose.msra.mxu0 0.0
      %612 = vmatprep.mubr.f32.mxu0 0.0
      %v613 = vand.u32 %v256, 4294901760
      %v614 = vsub.f32 %v256, %v613
      %615 = vmatmul.mubr.f32.gmra.mrb[0].mxu0 %v614
      %v616 = vpop.f32.mrb[0].mxu0
      %v617 = vadd.f32 %v501, %v616
      %v618 = vpop.f32.mrb[0].mxu0
      %619 = vmatprep.mubr.f32.mxu0 0.0
      %v620 = vand.u32 %v259, 4294901760
      %v621 = vsub.f32 %v259, %v620
      %622 = vmatmul.mubr.f32.gmra.mrb[0].mxu0 %v621
      %v623 = vpop.f32.mrb[0].mxu0
      %v624 = vadd.f32 %v507, %v623
      %v625 = vpop.f32.mrb[0].mxu0
      %626 = vmatprep.mubr.f32.mxu0 0.0
      %v627 = vand.u32 %v262, 4294901760
      %v628 = vsub.f32 %v262, %v627
      %629 = vmatmul.mubr.f32.gmra.mrb[0].mxu0 %v628
      %v630 = vpop.f32.mrb[0].mxu0
      %v631 = vadd.f32 %v513, %v630
      %v632 = vpop.f32.mrb[0].mxu0
      %633 = vmatprep.mubr.f32.mxu0 0.0
      %v634 = vand.u32 %v265, 4294901760
      %v635 = vsub.f32 %v265, %v634
      %636 = vmatmul.mubr.f32.gmra.mrb[0].mxu0 %v635
      %v637 = vpop.f32.mrb[0].mxu0
      %v638 = vadd.f32 %v519, %v637
      %v639 = vpop.f32.mrb[0].mxu0
      %640 = vmatprep.mubr.f32.mxu0 0.0
      %v641 = vand.u32 %v268, 4294901760
      %v642 = vsub.f32 %v268, %v641
      %643 = vmatmul.mubr.f32.gmra.mrb[0].mxu0 %v642
      %v644 = vpop.f32.mrb[0].mxu0
      %v645 = vadd.f32 %v525, %v644
      %v646 = vpop.f32.mrb[0].mxu0
      %647 = vmatprep.mubr.f32.mxu0 0.0
      %v648 = vand.u32 %v271, 4294901760
      %v649 = vsub.f32 %v271, %v648
      %650 = vmatmul.mubr.f32.gmra.mrb[0].mxu0 %v649
      %v651 = vpop.f32.mrb[0].mxu0
      %v652 = vadd.f32 %v531, %v651
      %v653 = vpop.f32.mrb[0].mxu0
      %654 = vmatprep.mubr.f32.mxu0 0.0
      %v655 = vand.u32 %v274, 4294901760
      %v656 = vsub.f32 %v274, %v655
      %657 = vmatmul.mubr.f32.gmra.mrb[0].mxu0 %v656
      %v658 = vpop.f32.mrb[0].mxu0
      %v659 = vadd.f32 %v537, %v658
      %v660 = vpop.f32.mrb[0].mxu0
      %661 = vmatprep.mubr.f32.mxu0 0.0
      %v662 = vand.u32 %v277, 4294901760
      %v663 = vsub.f32 %v277, %v662
      %664 = vmatmul.mubr.f32.gmra.mrb[0].mxu0 %v663
      %v665 = vpop.f32.mrb[0].mxu0
      %v666 = vadd.f32 %v543, %v665
      %v667 = vpop.f32.mrb[0].mxu0
      %668 = vdwg.mxu0
      %669 = vmatprep.subr.mxu0 0.0
      %v670 = vand.u32 %v280, 4294901760
      %671 = vmatpush1.xpose.msra.mxu0 %v670
      %672 = vmatprep.subr.mxu0 0.0
      %673 = vmatpush1.xpose.msra.mxu0 0.0
      %674 = vmatprep.subr.mxu0 0.0
      %675 = vmatpush1.xpose.msra.mxu0 0.0
      %676 = vmatprep.subr.mxu0 0.0
      %677 = vmatpush1.xpose.msra.mxu0 0.0
      %678 = vmatprep.subr.mxu0 0.0
      %679 = vmatpush1.xpose.msra.mxu0 0.0
      %680 = vmatprep.subr.mxu0 0.0
      %681 = vmatpush1.xpose.msra.mxu0 0.0
      %682 = vmatprep.subr.mxu0 0.0
      %683 = vmatpush1.xpose.msra.mxu0 0.0
      %684 = vmatprep.subr.mxu0 0.0
      %685 = vmatpush1.xpose.msra.mxu0 0.0
      %686 = vmatprep.subr.mxu0 0.0
      %687 = vmatpush1.xpose.msra.mxu0 0.0
      %688 = vmatprep.subr.mxu0 0.0
      %689 = vmatpush1.xpose.msra.mxu0 0.0
      %690 = vmatprep.subr.mxu0 0.0
      %691 = vmatpush1.xpose.msra.mxu0 0.0
      %692 = vmatprep.subr.mxu0 0.0
      %693 = vmatpush1.xpose.msra.mxu0 0.0
      %694 = vmatprep.subr.mxu0 0.0
      %695 = vmatpush1.xpose.msra.mxu0 0.0
      %696 = vmatprep.subr.mxu0 0.0
      %697 = vmatpush1.xpose.msra.mxu0 0.0
      %698 = vmatprep.subr.mxu0 0.0
      %699 = vmatpush1.xpose.msra.mxu0 0.0
      %700 = vmatprep.subr.mxu0 0.0
      %701 = vmatpush1.xpose.msra.mxu0 0.0
      %702 = vmatprep.subr.mxu0 0.0
      %703 = vmatpush1.xpose.msra.mxu0 0.0
      %704 = vmatprep.subr.mxu0 0.0
      %705 = vmatpush1.xpose.msra.mxu0 0.0
      %706 = vmatprep.subr.mxu0 0.0
      %707 = vmatpush1.xpose.msra.mxu0 0.0
      %708 = vmatprep.subr.mxu0 0.0
      %709 = vmatpush1.xpose.msra.mxu0 0.0
      %710 = vmatprep.subr.mxu0 0.0
      %711 = vmatpush1.xpose.msra.mxu0 0.0
      %712 = vmatprep.subr.mxu0 0.0
      %713 = vmatpush1.xpose.msra.mxu0 0.0
      %714 = vmatprep.subr.mxu0 0.0
      %715 = vmatpush1.xpose.msra.mxu0 0.0
      %716 = vmatprep.subr.mxu0 0.0
      %717 = vmatpush1.xpose.msra.mxu0 0.0
      %718 = vmatprep.subr.mxu0 0.0
      %719 = vmatpush1.xpose.msra.mxu0 0.0
      %720 = vmatprep.subr.mxu0 0.0
      %721 = vmatpush1.xpose.msra.mxu0 0.0
      %722 = vmatprep.subr.mxu0 0.0
      %723 = vmatpush1.xpose.msra.mxu0 0.0
      %724 = vmatprep.subr.mxu0 0.0
      %725 = vmatpush1.xpose.msra.mxu0 0.0
      %726 = vmatprep.subr.mxu0 0.0
      %727 = vmatpush1.xpose.msra.mxu0 0.0
      %728 = vmatprep.subr.mxu0 0.0
      %729 = vmatpush1.xpose.msra.mxu0 0.0
      %730 = vmatprep.subr.mxu0 0.0
      %731 = vmatpush1.xpose.msra.mxu0 0.0
      %732 = vmatprep.subr.mxu0 0.0
      %733 = vmatpush1.xpose.msra.mxu0 0.0
      %734 = vmatprep.mubr.f32.mxu0 0.0
      %v735 = vand.u32 %v256, 4294901760
      %v736 = vsub.f32 %v256, %v735
      %v737 = vand.u32 %v736, 4294901760
      %738 = vmatmul.mubr.f32.gmra.mrb[0].mxu0 %v737
      %v739 = vpop.f32.mrb[0].mxu0
      %v740 = vadd.f32 %v617, %v739
      %v741 = vpop.f32.mrb[0].mxu0
      %742 = vmatprep.mubr.f32.mxu0 0.0
      %v743 = vand.u32 %v259, 4294901760
      %v744 = vsub.f32 %v259, %v743
      %v745 = vand.u32 %v744, 4294901760
      %746 = vmatmul.mubr.f32.gmra.mrb[0].mxu0 %v745
      %v747 = vpop.f32.mrb[0].mxu0
      %v748 = vadd.f32 %v624, %v747
      %v749 = vpop.f32.mrb[0].mxu0
      %750 = vmatprep.mubr.f32.mxu0 0.0
      %v751 = vand.u32 %v262, 4294901760
      %v752 = vsub.f32 %v262, %v751
      %v753 = vand.u32 %v752, 4294901760
      %754 = vmatmul.mubr.f32.gmra.mrb[0].mxu0 %v753
      %v755 = vpop.f32.mrb[0].mxu0
      %v756 = vadd.f32 %v631, %v755
      %v757 = vpop.f32.mrb[0].mxu0
      %758 = vmatprep.mubr.f32.mxu0 0.0
      %v759 = vand.u32 %v265, 4294901760
      %v760 = vsub.f32 %v265, %v759
      %v761 = vand.u32 %v760, 4294901760
      %762 = vmatmul.mubr.f32.gmra.mrb[0].mxu0 %v761
      %v763 = vpop.f32.mrb[0].mxu0
      %v764 = vadd.f32 %v638, %v763
      %v765 = vpop.f32.mrb[0].mxu0
      %766 = vmatprep.mubr.f32.mxu0 0.0
      %v767 = vand.u32 %v268, 4294901760
      %v768 = vsub.f32 %v268, %v767
      %v769 = vand.u32 %v768, 4294901760
      %770 = vmatmul.mubr.f32.gmra.mrb[0].mxu0 %v769
      %v771 = vpop.f32.mrb[0].mxu0
      %v772 = vadd.f32 %v645, %v771
      %v773 = vpop.f32.mrb[0].mxu0
      %774 = vmatprep.mubr.f32.mxu0 0.0
      %v775 = vand.u32 %v271, 4294901760
      %v776 = vsub.f32 %v271, %v775
      %v777 = vand.u32 %v776, 4294901760
      %778 = vmatmul.mubr.f32.gmra.mrb[0].mxu0 %v777
      %v779 = vpop.f32.mrb[0].mxu0
      %v780 = vadd.f32 %v652, %v779
      %v781 = vpop.f32.mrb[0].mxu0
      %782 = vmatprep.mubr.f32.mxu0 0.0
      %v783 = vand.u32 %v274, 4294901760
      %v784 = vsub.f32 %v274, %v783
      %v785 = vand.u32 %v784, 4294901760
      %786 = vmatmul.mubr.f32.gmra.mrb[0].mxu0 %v785
      %v787 = vpop.f32.mrb[0].mxu0
      %v788 = vadd.f32 %v659, %v787
      %v789 = vpop.f32.mrb[0].mxu0
      %790 = vmatprep.mubr.f32.mxu0 0.0
      %v791 = vand.u32 %v277, 4294901760
      %v792 = vsub.f32 %v277, %v791
      %v793 = vand.u32 %v792, 4294901760
      %794 = vmatmul.mubr.f32.gmra.mrb[0].mxu0 %v793
      %v795 = vpop.f32.mrb[0].mxu0
      %v796 = vadd.f32 %v666, %v795
      %v797 = vpop.f32.mrb[0].mxu0
      %798 = vdwg.mxu0
      %799 = vmatprep.subr.mxu0 0.0
      %v800 = vand.u32 %v280, 4294901760
      %v801 = vsub.f32 %v280, %v800
      %v802 = vand.u32 %v801, 4294901760
      %803 = vmatpush1.xpose.msra.mxu0 %v802
      %804 = vmatprep.subr.mxu0 0.0
      %805 = vmatpush1.xpose.msra.mxu0 0.0
      %806 = vmatprep.subr.mxu0 0.0
      %807 = vmatpush1.xpose.msra.mxu0 0.0
      %808 = vmatprep.subr.mxu0 0.0
      %809 = vmatpush1.xpose.msra.mxu0 0.0
      %810 = vmatprep.subr.mxu0 0.0
      %811 = vmatpush1.xpose.msra.mxu0 0.0
      %812 = vmatprep.subr.mxu0 0.0
      %813 = vmatpush1.xpose.msra.mxu0 0.0
      %814 = vmatprep.subr.mxu0 0.0
      %815 = vmatpush1.xpose.msra.mxu0 0.0
      %816 = vmatprep.subr.mxu0 0.0
      %817 = vmatpush1.xpose.msra.mxu0 0.0
      %818 = vmatprep.subr.mxu0 0.0
      %819 = vmatpush1.xpose.msra.mxu0 0.0
      %820 = vmatprep.subr.mxu0 0.0
      %821 = vmatpush1.xpose.msra.mxu0 0.0
      %822 = vmatprep.subr.mxu0 0.0
      %823 = vmatpush1.xpose.msra.mxu0 0.0
      %824 = vmatprep.subr.mxu0 0.0
      %825 = vmatpush1.xpose.msra.mxu0 0.0
      %826 = vmatprep.subr.mxu0 0.0
      %827 = vmatpush1.xpose.msra.mxu0 0.0
      %828 = vmatprep.subr.mxu0 0.0
      %829 = vmatpush1.xpose.msra.mxu0 0.0
      %830 = vmatprep.subr.mxu0 0.0
      %831 = vmatpush1.xpose.msra.mxu0 0.0
      %832 = vmatprep.subr.mxu0 0.0
      %833 = vmatpush1.xpose.msra.mxu0 0.0
      %834 = vmatprep.subr.mxu0 0.0
      %835 = vmatpush1.xpose.msra.mxu0 0.0
      %836 = vmatprep.subr.mxu0 0.0
      %837 = vmatpush1.xpose.msra.mxu0 0.0
      %838 = vmatprep.subr.mxu0 0.0
      %839 = vmatpush1.xpose.msra.mxu0 0.0
      %840 = vmatprep.subr.mxu0 0.0
      %841 = vmatpush1.xpose.msra.mxu0 0.0
      %842 = vmatprep.subr.mxu0 0.0
      %843 = vmatpush1.xpose.msra.mxu0 0.0
      %844 = vmatprep.subr.mxu0 0.0
      %845 = vmatpush1.xpose.msra.mxu0 0.0
      %846 = vmatprep.subr.mxu0 0.0
      %847 = vmatpush1.xpose.msra.mxu0 0.0
      %848 = vmatprep.subr.mxu0 0.0
      %849 = vmatpush1.xpose.msra.mxu0 0.0
      %850 = vmatprep.subr.mxu0 0.0
      %851 = vmatpush1.xpose.msra.mxu0 0.0
      %852 = vmatprep.subr.mxu0 0.0
      %853 = vmatpush1.xpose.msra.mxu0 0.0
      %854 = vmatprep.subr.mxu0 0.0
      %855 = vmatpush1.xpose.msra.mxu0 0.0
      %856 = vmatprep.subr.mxu0 0.0
      %857 = vmatpush1.xpose.msra.mxu0 0.0
      %858 = vmatprep.subr.mxu0 0.0
      %859 = vmatpush1.xpose.msra.mxu0 0.0
      %860 = vmatprep.subr.mxu0 0.0
      %861 = vmatpush1.xpose.msra.mxu0 0.0
      %862 = vmatprep.subr.mxu0 0.0
      %863 = vmatpush1.xpose.msra.mxu0 0.0
      %864 = vmatprep.subr.mxu0 0.0
      %865 = vmatpush1.xpose.msra.mxu0 0.0
      %866 = vmatprep.mubr.f32.mxu0 0.0
      %v867 = vand.u32 %v256, 4294901760
      %868 = vmatmul.mubr.f32.gmra.mrb[0].mxu0 %v867
      %v869 = vpop.f32.mrb[0].mxu0
      %v870 = vadd.f32 %v740, %v869
      %v871 = vpop.f32.mrb[0].mxu0
      %872 = vmatprep.mubr.f32.mxu0 0.0
      %v873 = vand.u32 %v259, 4294901760
      %874 = vmatmul.mubr.f32.gmra.mrb[0].mxu0 %v873
      %v875 = vpop.f32.mrb[0].mxu0
      %v876 = vadd.f32 %v748, %v875
      %v877 = vpop.f32.mrb[0].mxu0
      %878 = vmatprep.mubr.f32.mxu0 0.0
      %v879 = vand.u32 %v262, 4294901760
      %880 = vmatmul.mubr.f32.gmra.mrb[0].mxu0 %v879
      %v881 = vpop.f32.mrb[0].mxu0
      %v882 = vadd.f32 %v756, %v881
      %v883 = vpop.f32.mrb[0].mxu0
      %884 = vmatprep.mubr.f32.mxu0 0.0
      %v885 = vand.u32 %v265, 4294901760
      %886 = vmatmul.mubr.f32.gmra.mrb[0].mxu0 %v885
      %v887 = vpop.f32.mrb[0].mxu0
      %v888 = vadd.f32 %v764, %v887
      %v889 = vpop.f32.mrb[0].mxu0
      %890 = vmatprep.mubr.f32.mxu0 0.0
      %v891 = vand.u32 %v268, 4294901760
      %892 = vmatmul.mubr.f32.gmra.mrb[0].mxu0 %v891
      %v893 = vpop.f32.mrb[0].mxu0
      %v894 = vadd.f32 %v772, %v893
      %v895 = vpop.f32.mrb[0].mxu0
      %896 = vmatprep.mubr.f32.mxu0 0.0
      %v897 = vand.u32 %v271, 4294901760
      %898 = vmatmul.mubr.f32.gmra.mrb[0].mxu0 %v897
      %v899 = vpop.f32.mrb[0].mxu0
      %v900 = vadd.f32 %v780, %v899
      %v901 = vpop.f32.mrb[0].mxu0
      %902 = vmatprep.mubr.f32.mxu0 0.0
      %v903 = vand.u32 %v274, 4294901760
      %904 = vmatmul.mubr.f32.gmra.mrb[0].mxu0 %v903
      %v905 = vpop.f32.mrb[0].mxu0
      %v906 = vadd.f32 %v788, %v905
      %v907 = vpop.f32.mrb[0].mxu0
      %908 = vmatprep.mubr.f32.mxu0 0.0
      %v909 = vand.u32 %v277, 4294901760
      %910 = vmatmul.mubr.f32.gmra.mrb[0].mxu0 %v909
      %v911 = vpop.f32.mrb[0].mxu0
      %v912 = vadd.f32 %v796, %v911
      %v913 = vpop.f32.mrb[0].mxu0
      %914 = vdwg.mxu0
      %915 = vmatprep.subr.mxu0 0.0
      %v916 = vand.u32 %v280, 4294901760
      %917 = vmatpush1.xpose.msra.mxu0 %v916
      %918 = vmatprep.subr.mxu0 0.0
      %919 = vmatpush1.xpose.msra.mxu0 0.0
      %920 = vmatprep.subr.mxu0 0.0
      %921 = vmatpush1.xpose.msra.mxu0 0.0
      %922 = vmatprep.subr.mxu0 0.0
      %923 = vmatpush1.xpose.msra.mxu0 0.0
      %924 = vmatprep.subr.mxu0 0.0
      %925 = vmatpush1.xpose.msra.mxu0 0.0
      %926 = vmatprep.subr.mxu0 0.0
      %927 = vmatpush1.xpose.msra.mxu0 0.0
      %928 = vmatprep.subr.mxu0 0.0
      %929 = vmatpush1.xpose.msra.mxu0 0.0
      %930 = vmatprep.subr.mxu0 0.0
      %931 = vmatpush1.xpose.msra.mxu0 0.0
      %932 = vmatprep.subr.mxu0 0.0
      %933 = vmatpush1.xpose.msra.mxu0 0.0
      %934 = vmatprep.subr.mxu0 0.0
      %935 = vmatpush1.xpose.msra.mxu0 0.0
      %936 = vmatprep.subr.mxu0 0.0
      %937 = vmatpush1.xpose.msra.mxu0 0.0
      %938 = vmatprep.subr.mxu0 0.0
      %939 = vmatpush1.xpose.msra.mxu0 0.0
      %940 = vmatprep.subr.mxu0 0.0
      %941 = vmatpush1.xpose.msra.mxu0 0.0
      %942 = vmatprep.subr.mxu0 0.0
      %943 = vmatpush1.xpose.msra.mxu0 0.0
      %944 = vmatprep.subr.mxu0 0.0
      %945 = vmatpush1.xpose.msra.mxu0 0.0
      %946 = vmatprep.subr.mxu0 0.0
      %947 = vmatpush1.xpose.msra.mxu0 0.0
      %948 = vmatprep.subr.mxu0 0.0
      %949 = vmatpush1.xpose.msra.mxu0 0.0
      %950 = vmatprep.subr.mxu0 0.0
      %951 = vmatpush1.xpose.msra.mxu0 0.0
      %952 = vmatprep.subr.mxu0 0.0
      %953 = vmatpush1.xpose.msra.mxu0 0.0
      %954 = vmatprep.subr.mxu0 0.0
      %955 = vmatpush1.xpose.msra.mxu0 0.0
      %956 = vmatprep.subr.mxu0 0.0
      %957 = vmatpush1.xpose.msra.mxu0 0.0
      %958 = vmatprep.subr.mxu0 0.0
      %959 = vmatpush1.xpose.msra.mxu0 0.0
      %960 = vmatprep.subr.mxu0 0.0
      %961 = vmatpush1.xpose.msra.mxu0 0.0
      %962 = vmatprep.subr.mxu0 0.0
      %963 = vmatpush1.xpose.msra.mxu0 0.0
      %964 = vmatprep.subr.mxu0 0.0
      %965 = vmatpush1.xpose.msra.mxu0 0.0
      %966 = vmatprep.subr.mxu0 0.0
      %967 = vmatpush1.xpose.msra.mxu0 0.0
      %968 = vmatprep.subr.mxu0 0.0
      %969 = vmatpush1.xpose.msra.mxu0 0.0
      %970 = vmatprep.subr.mxu0 0.0
      %971 = vmatpush1.xpose.msra.mxu0 0.0
      %972 = vmatprep.subr.mxu0 0.0
      %973 = vmatpush1.xpose.msra.mxu0 0.0
      %974 = vmatprep.subr.mxu0 0.0
      %975 = vmatpush1.xpose.msra.mxu0 0.0
      %976 = vmatprep.subr.mxu0 0.0
      %977 = vmatpush1.xpose.msra.mxu0 0.0
      %978 = vmatprep.subr.mxu0 0.0
      %979 = vmatpush1.xpose.msra.mxu0 0.0
      %980 = vmatprep.mubr.f32.mxu0 0.0
      %v981 = vand.u32 %v256, 4294901760
      %982 = vmatmul.mubr.f32.gmra.mrb[0].mxu0 %v981
      %v983 = vpop.f32.mrb[0].mxu0
      %v984 = vadd.f32 %v870, %v983
      %v985 = vpop.f32.mrb[0].mxu0
      %986 = vmatprep.mubr.f32.mxu0 0.0
      %v987 = vand.u32 %v259, 4294901760
      %988 = vmatmul.mubr.f32.gmra.mrb[0].mxu0 %v987
      %v989 = vpop.f32.mrb[0].mxu0
      %v990 = vadd.f32 %v876, %v989
      %v991 = vpop.f32.mrb[0].mxu0
      %992 = vmatprep.mubr.f32.mxu0 0.0
      %v993 = vand.u32 %v262, 4294901760
      %994 = vmatmul.mubr.f32.gmra.mrb[0].mxu0 %v993
      %v995 = vpop.f32.mrb[0].mxu0
      %v996 = vadd.f32 %v882, %v995
      %v997 = vpop.f32.mrb[0].mxu0
      %998 = vmatprep.mubr.f32.mxu0 0.0
      %v999 = vand.u32 %v265, 4294901760
      %1000 = vmatmul.mubr.f32.gmra.mrb[0].mxu0 %v999
      %v1001 = vpop.f32.mrb[0].mxu0
      %v1002 = vadd.f32 %v888, %v1001
      %v1003 = vpop.f32.mrb[0].mxu0
      %1004 = vmatprep.mubr.f32.mxu0 0.0
      %v1005 = vand.u32 %v268, 4294901760
      %1006 = vmatmul.mubr.f32.gmra.mrb[0].mxu0 %v1005
      %v1007 = vpop.f32.mrb[0].mxu0
      %v1008 = vadd.f32 %v894, %v1007
      %v1009 = vpop.f32.mrb[0].mxu0
      %1010 = vmatprep.mubr.f32.mxu0 0.0
      %v1011 = vand.u32 %v271, 4294901760
      %1012 = vmatmul.mubr.f32.gmra.mrb[0].mxu0 %v1011
      %v1013 = vpop.f32.mrb[0].mxu0
      %v1014 = vadd.f32 %v900, %v1013
      %v1015 = vpop.f32.mrb[0].mxu0
      %1016 = vmatprep.mubr.f32.mxu0 0.0
      %v1017 = vand.u32 %v274, 4294901760
      %1018 = vmatmul.mubr.f32.gmra.mrb[0].mxu0 %v1017
      %v1019 = vpop.f32.mrb[0].mxu0
      %v1020 = vadd.f32 %v906, %v1019
      %v1021 = vpop.f32.mrb[0].mxu0
      %1022 = vmatprep.mubr.f32.mxu0 0.0
      %v1023 = vand.u32 %v277, 4294901760
      %1024 = vmatmul.mubr.f32.gmra.mrb[0].mxu0 %v1023
      %v1025 = vpop.f32.mrb[0].mxu0
      %v1026 = vadd.f32 %v912, %v1025
      %v1027 = vpop.f32.mrb[0].mxu0
      %1028 = vdwg.mxu0
      %v1029 = vadd.f32 %v246, %v984
      %v1030 = vadd.f32 %v247, %v990
      %v1031 = vadd.f32 %v248, %v996
      %v1032 = vadd.f32 %v249, %v1002
      %v1033 = vadd.f32 %v250, %v1008
      %v1034 = vadd.f32 %v251, %v1014
      %v1035 = vadd.f32 %v252, %v1020
      %v1036 = vadd.f32 %v253, %v1026
      %vm1037 = vcmask 64512
      %1038 = vst.msk [vmem:[#allocation2] sm:$0xff] %vm1037, %v1029
      %1039 = vst.msk [vmem:[#allocation2 + $0x8] sm:$0xff] %vm1037, %v1030
      %1040 = vst.msk [vmem:[#allocation2 + $0x10] sm:$0xff] %vm1037, %v1031
      %1041 = vst.msk [vmem:[#allocation2 + $0x18] sm:$0xff] %vm1037, %v1032
      %1042 = vst.msk [vmem:[#allocation2 + $0x20] sm:$0xff] %vm1037, %v1033
      %1043 = vst.msk [vmem:[#allocation2 + $0x28] sm:$0xff] %vm1037, %v1034
      %1044 = vst.msk [vmem:[#allocation2 + $0x30] sm:$0xff] %vm1037, %v1035
      %1045 = vst.msk [vmem:[#allocation2 + $0x38] sm:$0xff] %vm1037, %v1036
      // Predicated region
      $region33: #{_forward_impl.3} parent=27 // pred_check
        %p1046 = pneg %p164
      $region34: #{_forward_impl.3} parent=27 // pred_check_branch
        %1048 = sbr.rel (%p1046) target = $region36
      $region35: #{_forward_impl.3} parent=27 // pred_region
        %v1049 = vld [vmem:[#allocation2] sm:$0xff]
        %v1050 = vld [vmem:[#allocation2 + $0x8] sm:$0xff]
        %v1051 = vld [vmem:[#allocation2 + $0x10] sm:$0xff]
        %v1052 = vld [vmem:[#allocation2 + $0x18] sm:$0xff]
        %v1053 = vld [vmem:[#allocation2 + $0x20] sm:$0xff]
        %v1054 = vld [vmem:[#allocation2 + $0x28] sm:$0xff]
        %v1055 = vld [vmem:[#allocation2 + $0x30] sm:$0xff]
        %v1056 = vld [vmem:[#allocation2 + $0x38] sm:$0xff]
        %v1057 = vmul.f32 %v1049, %v1049
        %v1058 = vmul.f32 %v1050, %v1050
        %v1059 = vmul.f32 %v1051, %v1051
        %v1060 = vmul.f32 %v1052, %v1052
        %v1061 = vmul.f32 %v1053, %v1053
        %v1062 = vmul.f32 %v1054, %v1054
        %v1063 = vmul.f32 %v1055, %v1055
        %v1064 = vmul.f32 %v1056, %v1056
        %v1065 = vsel %vm1037, %v1057, 0.0
        %1066 = vadd.xlane.f32.xlu0 %v1065
        %v1067 = vpop.xlane.xlu0 %1066
        %v1068 = vsel %vm1037, %v1058, 0.0
        %1069 = vadd.xlane.f32.xlu0 %v1068
        %v1070 = vpop.xlane.xlu0 %1069
        %v1071 = vsel %vm1037, %v1059, 0.0
        %1072 = vadd.xlane.f32.xlu0 %v1071
        %v1073 = vpop.xlane.xlu0 %1072
        %v1074 = vsel %vm1037, %v1060, 0.0
        %1075 = vadd.xlane.f32.xlu0 %v1074
        %v1076 = vpop.xlane.xlu0 %1075
        %v1077 = vsel %vm1037, %v1061, 0.0
        %1078 = vadd.xlane.f32.xlu0 %v1077
        %v1079 = vpop.xlane.xlu0 %1078
        %v1080 = vsel %vm1037, %v1062, 0.0
        %1081 = vadd.xlane.f32.xlu0 %v1080
        %v1082 = vpop.xlane.xlu0 %1081
        %v1083 = vsel %vm1037, %v1063, 0.0
        %1084 = vadd.xlane.f32.xlu0 %v1083
        %v1085 = vpop.xlane.xlu0 %1084
        %v1086 = vsel %vm1037, %v1064, 0.0
        %1087 = vadd.xlane.f32.xlu0 %v1086
        %v1088 = vpop.xlane.xlu0 %1087
        %v1089 = vrsqrt.pop %v1067
        %v1090 = vmul.f32 %v1067, %v1089
        %vm1091 = vcmp.eq.f32.partialorder %v1067, inf
        %v1092 = vsel %vm1091, %v1067, %v1090
        %vm1093 = vcmp.eq.f32.partialorder %v1067, 0.0
        %v1094 = vand.u32 %v1067, 2147483648
        %v1095 = vsel %vm1093, %v1094, %v1092
        %v1096 = vrsqrt.pop %v1070
        %v1097 = vmul.f32 %v1070, %v1096
        %vm1098 = vcmp.eq.f32.partialorder %v1070, inf
        %v1099 = vsel %vm1098, %v1070, %v1097
        %vm1100 = vcmp.eq.f32.partialorder %v1070, 0.0
        %v1101 = vand.u32 %v1070, 2147483648
        %v1102 = vsel %vm1100, %v1101, %v1099
        %v1103 = vrsqrt.pop %v1073
        %v1104 = vmul.f32 %v1073, %v1103
        %vm1105 = vcmp.eq.f32.partialorder %v1073, inf
        %v1106 = vsel %vm1105, %v1073, %v1104
        %vm1107 = vcmp.eq.f32.partialorder %v1073, 0.0
        %v1108 = vand.u32 %v1073, 2147483648
        %v1109 = vsel %vm1107, %v1108, %v1106
        %v1110 = vrsqrt.pop %v1076
        %v1111 = vmul.f32 %v1076, %v1110
        %vm1112 = vcmp.eq.f32.partialorder %v1076, inf
        %v1113 = vsel %vm1112, %v1076, %v1111
        %vm1114 = vcmp.eq.f32.partialorder %v1076, 0.0
        %v1115 = vand.u32 %v1076, 2147483648
        %v1116 = vsel %vm1114, %v1115, %v1113
        %v1117 = vrsqrt.pop %v1079
        %v1118 = vmul.f32 %v1079, %v1117
        %vm1119 = vcmp.eq.f32.partialorder %v1079, inf
        %v1120 = vsel %vm1119, %v1079, %v1118
        %vm1121 = vcmp.eq.f32.partialorder %v1079, 0.0
        %v1122 = vand.u32 %v1079, 2147483648
        %v1123 = vsel %vm1121, %v1122, %v1120
        %v1124 = vrsqrt.pop %v1082
        %v1125 = vmul.f32 %v1082, %v1124
        %vm1126 = vcmp.eq.f32.partialorder %v1082, inf
        %v1127 = vsel %vm1126, %v1082, %v1125
        %vm1128 = vcmp.eq.f32.partialorder %v1082, 0.0
        %v1129 = vand.u32 %v1082, 2147483648
        %v1130 = vsel %vm1128, %v1129, %v1127
        %v1131 = vrsqrt.pop %v1085
        %v1132 = vmul.f32 %v1085, %v1131
        %vm1133 = vcmp.eq.f32.partialorder %v1085, inf
        %v1134 = vsel %vm1133, %v1085, %v1132
        %vm1135 = vcmp.eq.f32.partialorder %v1085, 0.0
        %v1136 = vand.u32 %v1085, 2147483648
        %v1137 = vsel %vm1135, %v1136, %v1134
        %v1138 = vrsqrt.pop %v1088
        %v1139 = vmul.f32 %v1088, %v1138
        %vm1140 = vcmp.eq.f32.partialorder %v1088, inf
        %v1141 = vsel %vm1140, %v1088, %v1139
        %vm1142 = vcmp.eq.f32.partialorder %v1088, 0.0
        %v1143 = vand.u32 %v1088, 2147483648
        %v1144 = vsel %vm1142, %v1143, %v1141
        %v1145 = vadd.f32 %v1095, 1e-07
        %v1146 = vadd.f32 %v1102, 1e-07
        %v1147 = vadd.f32 %v1109, 1e-07
        %v1148 = vadd.f32 %v1116, 1e-07
        %v1149 = vadd.f32 %v1123, 1e-07
        %v1150 = vadd.f32 %v1130, 1e-07
        %v1151 = vadd.f32 %v1137, 1e-07
        %v1152 = vadd.f32 %v1144, 1e-07
        %v1153 = vrcp.pop %v1145
        %v1154 = vrcp.pop %v1146
        %v1155 = vrcp.pop %v1147
        %v1156 = vrcp.pop %v1148
        %v1157 = vrcp.pop %v1149
        %v1158 = vrcp.pop %v1150
        %v1159 = vrcp.pop %v1151
        %v1160 = vrcp.pop %v1152
        %v1161 = vmul.f32 %v1049, %v1153
        %v1162 = vmul.f32 %v1050, %v1154
        %v1163 = vmul.f32 %v1051, %v1155
        %v1164 = vmul.f32 %v1052, %v1156
        %v1165 = vmul.f32 %v1053, %v1157
        %v1166 = vmul.f32 %v1054, %v1158
        %v1167 = vmul.f32 %v1055, %v1159
        %v1168 = vmul.f32 %v1056, %v1160
        %1169 = vst.msk [vmem:[%s163] sm:$0xff] %vm1037, %v1161
        %1170 = vst.msk [vmem:[%s163 + $0x8] sm:$0xff] %vm1037, %v1162
        %1171 = vst.msk [vmem:[%s163 + $0x10] sm:$0xff] %vm1037, %v1163
        %1172 = vst.msk [vmem:[%s163 + $0x18] sm:$0xff] %vm1037, %v1164
        %1173 = vst.msk [vmem:[%s163 + $0x20] sm:$0xff] %vm1037, %v1165
        %1174 = vst.msk [vmem:[%s163 + $0x28] sm:$0xff] %vm1037, %v1166
        %1175 = vst.msk [vmem:[%s163 + $0x30] sm:$0xff] %vm1037, %v1167
        %1176 = vst.msk [vmem:[%s163 + $0x38] sm:$0xff] %vm1037, %v1168
      $region36: #{_forward_impl.3} parent=27 // pred_fallthru
        _
      %p1177 = scmp.lt.s32.totalorder %s17, 1
      %s1178 = scalar_select %p1177, %s17, 1
      %s1179 = smul.addr %s1178, 8
      %s1180 = smul.addr %s1179, 8
      %s1181 = scalar_lea.vmem %s2, %s1180
      // Predicated region
      $region37: #{_forward_impl.3} parent=27 // pred_check
        %p1182 = pneg %p92
      $region38: #{_forward_impl.3} parent=27 // pred_check_branch
        %1184 = sbr.rel (%p1182) target = $region40
      $region39: #{_forward_impl.3} parent=27 // pred_region
        _
      $region40: #{_forward_impl.3} parent=27 // pred_fallthru
        _
    $region28: #{_forward_impl.3} parent=5 // pred_fallthru
      _
    %p1185 = scmp.le.s32.totalorder 2, %s8
    // Predicated region
    $region41: #{_forward_impl.3} parent=5 // pred_check
      %p1186 = pneg %p1185
    $region42: #{_forward_impl.3} parent=5 // pred_check_branch
      %1188 = sbr.rel (%p1186) target = $region44
    $region43: #{_forward_impl.3} parent=5 // pred_region
      %s1189 = ssub.s32 %s8, 2
      // Predicated region
      $region45: #{_forward_impl.3} parent=43 // pred_check
        %p1190 = pneg %p98
      $region46: #{_forward_impl.3} parent=43 // pred_check_branch
        %1192 = sbr.rel (%p1190) target = $region48
      $region47: #{_forward_impl.3} parent=43 // pred_region
        %p1193 = scmp.lt.s32.totalorder %s19, 1
        %s1194 = scalar_select %p1193, %s19, 1
        %s1195 = smul.addr %s1194, 8
        %s1196 = smul.addr %s1195, 8
        %s1197 = scalar_lea.vmem %s2, %s1196
      $region48: #{_forward_impl.3} parent=43 // pred_fallthru
        _
    $region44: #{_forward_impl.3} parent=5 // pred_fallthru
      _
  $region6: #{_forward_impl.3} parent=0 // loop_footer
    %s12 = sadd.s32 1, %s8
  $region7: #{_forward_impl.3} parent=0 // loop_footer_branch
    %7 = sbr.rel target = $region3
  $region8: #{_forward_impl.3} parent=0 // loop_exit
    _

</llo_original>
